<compile_context>
chip_gen: v7x
topology: tpu7x:2x2x1
jax: 0.10.0
libtpu: 0.0.40
codegen_flags: <defaults>
</compile_context>

<pallas_src>
import functools

import jax
import jax.numpy as jnp
from jax.experimental import pallas as pl
from jax.experimental.pallas import tpu as pltpu


HIDDEN = 64
PACKED = 2 * HIDDEN          # two batch sub-tiles packed along the 128 lanes
IN_DIM = 2
OUT_DIM = 1
N_RES_LAYERS = 7             # fc2 .. fc8


def _mlp_resnet_kernel(xp_ref, w1_ref, b1_ref, ws_ref, bs_ref, w9_ref, b9_ref,
                       o_ref):
    bf16 = jnp.bfloat16

    # ---- fc1 (packed K=4): tiny bf16 MXU dot, f32 accumulate --------------
    xp = xp_ref[...].astype(bf16)                       # (T, 4)
    h = jnp.dot(xp, w1_ref[...], preferred_element_type=jnp.float32)
    h = jnp.tanh(h + b1_ref[...])                       # (T, 128) f32

    # ---- fc2..fc8: bf16 block-diag 128x128 MXU matmuls + f32 residual -----
    # (bias add / tanh / residual kept in f32: v5e has no bf16 VPU/EUP and it
    #  keeps the matched-reference validation tight.)
    for k in range(N_RES_LAYERS):
        w = ws_ref[k]                                   # (128, 128) bf16
        b = bs_ref[k]                                   # (1, 128)  f32
        z = jnp.dot(h.astype(bf16), w, preferred_element_type=jnp.float32)
        h = jnp.tanh(z + b) + h

    # ---- fc9 (N=1): pre-masked f32 weight rows -> two lane reductions,
    #      single lane-dense store ------------------------------------------
    out_a = jnp.sum(h * w9_ref[0:1, :], axis=-1, keepdims=True)   # (T, 1)
    out_b = jnp.sum(h * w9_ref[1:2, :], axis=-1, keepdims=True)   # (T, 1)
    o_ref[...] = (jnp.concatenate([out_a, out_b], axis=-1)
                  + b9_ref[...]).astype(o_ref.dtype)


def pack_params(params):
    """Pack (W (in,out), b (1,out)) params into the lane-packed kernel layout."""
    (w1, b1), *mid, (w9, b9) = params
    f32, bf16 = jnp.float32, jnp.bfloat16

    # fc1: block-diag (4, 128), bf16 operands for the MXU.
    w1p = jnp.zeros((2 * IN_DIM, PACKED), bf16)
    w1p = w1p.at[:IN_DIM, :HIDDEN].set(w1.astype(bf16))
    w1p = w1p.at[IN_DIM:, HIDDEN:].set(w1.astype(bf16))
    b1p = jnp.concatenate([b1.reshape(1, HIDDEN)] * 2, axis=1).astype(f32)

    # fc2..fc8: stacked block-diag (7, 128, 128) bf16 + (7, 1, 128) f32 biases.
    ws, bs = [], []
    for (w, b) in mid:
        wp = jnp.zeros((PACKED, PACKED), bf16)
        wp = wp.at[:HIDDEN, :HIDDEN].set(w.astype(bf16))
        wp = wp.at[HIDDEN:, HIDDEN:].set(w.astype(bf16))
        ws.append(wp)
        bs.append(jnp.concatenate([b.reshape(1, HIDDEN)] * 2, axis=1).astype(f32))
    ws = jnp.stack(ws)                                  # (7, 128, 128) bf16
    bs = jnp.stack(bs)                                  # (7, 1, 128)   f32

    # fc9: pre-masked per batch half (removes in-kernel iota / selects).
    w9f = jnp.asarray(w9, f32).reshape(HIDDEN)
    w9p = jnp.zeros((2, PACKED), f32)
    w9p = w9p.at[0, :HIDDEN].set(w9f)
    w9p = w9p.at[1, HIDDEN:].set(w9f)
    b9p = jnp.full((1, 2), jnp.asarray(b9, f32).reshape(()), f32)
    return w1p, b1p, ws, bs, w9p, b9p


@functools.partial(jax.jit, static_argnames=("tile_half",))
def u_net_deep_narrow_resnet_forward(x, packed, tile_half=2048):
    """x: (N, 2) float32; packed: output of pack_params. Returns (N, 1) f32."""
    w1p, b1p, ws, bs, w9p, b9p = packed
    n = x.shape[0]

    # Two batch sub-tiles are packed along the lanes: the kernel sees half the
    # rows, each carrying 2*IN_DIM input features and producing 2 outputs.
    half = max(8, (((n + 1) // 2) + 7) // 8 * 8)
    th = max(8, (min(tile_half, half) // 8) * 8)
    # v7x megacore: guarantee >= 2 grid steps so both TensorCores get work.
    if half >= 16:
        th = min(th, max(8, ((half // 2 + 7) // 8) * 8))
    half = ((half + th - 1) // th) * th
    n_pad = 2 * half

    x = x.astype(jnp.float32)
    x_pad = jnp.pad(x, ((0, n_pad - n), (0, 0)))
    xp = jnp.concatenate([x_pad[:half], x_pad[half:]], axis=1)       # (half, 4)

    grid = (half // th,)

    # Advisory cost hint so XLA schedules the surrounding pad/concat/slice ops
    # (and any neighboring work) around the kernel sensibly.
    flops = half * (2 * (2 * IN_DIM) * PACKED
                    + N_RES_LAYERS * 2 * PACKED * PACKED
                    + 4 * PACKED)
    transcendentals = half * (N_RES_LAYERS + 1) * PACKED
    bytes_accessed = (half * (2 * IN_DIM) * 4 + half * 2 * 4
                      + w1p.size * 2 + ws.size * 2
                      + (b1p.size + bs.size + w9p.size + b9p.size) * 4)
    cost = pl.CostEstimate(flops=int(flops),
                           transcendentals=int(transcendentals),
                           bytes_accessed=int(bytes_accessed))

    outp = pl.pallas_call(
        _mlp_resnet_kernel,
        out_shape=jax.ShapeDtypeStruct((half, 2), jnp.float32),
        grid=grid,
        in_specs=[
            pl.BlockSpec((th, 2 * IN_DIM), lambda i: (i, 0)),        # x tile
            pl.BlockSpec((2 * IN_DIM, PACKED), lambda i: (0, 0)),    # fc1 W (bf16)
            pl.BlockSpec((1, PACKED), lambda i: (0, 0)),             # fc1 b
            pl.BlockSpec((N_RES_LAYERS, PACKED, PACKED),
                         lambda i: (0, 0, 0)),                       # fc2..8 W (bf16)
            pl.BlockSpec((N_RES_LAYERS, 1, PACKED),
                         lambda i: (0, 0, 0)),                       # fc2..8 b
            pl.BlockSpec((2, PACKED), lambda i: (0, 0)),             # fc9 W (pre-masked)
            pl.BlockSpec((1, 2), lambda i: (0, 0)),                  # fc9 b
        ],
        out_specs=pl.BlockSpec((th, 2), lambda i: (i, 0)),
        compiler_params=pltpu.CompilerParams(
            dimension_semantics=("parallel",),
            vmem_limit_bytes=32 * 1024 * 1024),
        cost_estimate=cost,
    )(xp, w1p, b1p, ws, bs, w9p, b9p)

    out = jnp.concatenate([outp[:, 0:1], outp[:, 1:2]], axis=0)      # (n_pad, 1)
    return out[:n]


def init_params(key):
    """PyTorch nn.Linear-style init. W stored as (in, out); b as (1, out)."""
    dims = [(IN_DIM, HIDDEN)] + [(HIDDEN, HIDDEN)] * 7 + [(HIDDEN, OUT_DIM)]
    params = []
    for (fan_in, fan_out) in dims:
        key, kw, kb = jax.random.split(key, 3)
        bound = 1.0 / (fan_in ** 0.5)
        w = jax.random.uniform(kw, (fan_in, fan_out), jnp.float32,
                               minval=-bound, maxval=bound)
        b = jax.random.uniform(kb, (1, fan_out), jnp.float32,
                               minval=-bound, maxval=bound)
        params.append((w, b))
    return params


def reference_forward(x, params):
    """Plain-JAX f32 reference of the PyTorch forward (loose sanity check)."""
    (w1, b1), *mid, (w9, b9) = params
    h = jnp.tanh(x @ w1 + b1)
    for (w, b) in mid:
        h = jnp.tanh(h @ w + b) + h
    return h @ w9 + b9


def reference_forward_bf16_matched(x, params):
    """Reference mirroring the kernel's numerics exactly:
    bf16 matmul operands, f32 accumulation, f32 bias/tanh/residual, fc9 as an
    f32 elementwise multiply + lane reduction."""
    (w1, b1), *mid, (w9, b9) = params
    bf16 = jnp.bfloat16
    h = jnp.tanh(jnp.dot(x.astype(bf16), w1.astype(bf16),
                         preferred_element_type=jnp.float32) + b1)
    for (w, b) in mid:
        z = jnp.dot(h.astype(bf16), w.astype(bf16),
                    preferred_element_type=jnp.float32)
        h = jnp.tanh(z + b) + h
    return jnp.sum(h * w9.reshape(1, HIDDEN), axis=-1, keepdims=True) + b9


if __name__ == "__main__":
    key = jax.random.PRNGKey(0)
    key, kx = jax.random.split(key)

    params = init_params(key)
    packed = pack_params(params)

    for batch in (200, 5):            # non-aligned batches exercise padding
        kx, kb = jax.random.split(kx)
        x = jax.random.normal(kb, (batch, IN_DIM), jnp.float32)

        ref_f32 = reference_forward(x, params)
        ref_bf16 = reference_forward_bf16_matched(x, params)

        # Default (large) tile path and a tiny-tile multi-step grid path.
        for tile_half in (2048, 16):
            out = u_net_deep_narrow_resnet_forward(x, packed,
                                                   tile_half=tile_half)
            out = jax.block_until_ready(out)
            assert out.shape == (batch, OUT_DIM)

            err_m = float(jnp.max(jnp.abs(out - ref_bf16)))
            assert jnp.allclose(out, ref_bf16, atol=1e-3, rtol=1e-3), (
                f"kernel vs matched-bf16 reference mismatch "
                f"(batch={batch}, tile_half={tile_half}): max abs diff {err_m}")

            err_f = float(jnp.max(jnp.abs(out - ref_f32)))
            assert jnp.allclose(out, ref_f32, atol=1e-1, rtol=1e-1), (
                f"kernel vs f32 reference sanity mismatch "
                f"(batch={batch}, tile_half={tile_half}): max abs diff {err_f}")

    print("KERNEL_OK")
</pallas_src>

<mosaic_0001>
module attributes {stable_mosaic.version = 11 : i64} {
  func.func @_mlp_resnet_kernel(%arg0: i32, %arg1: memref<56x4xf32, #tpu.memory_space<vmem>>, %arg2: memref<4x128xbf16, #tpu.memory_space<vmem>>, %arg3: memref<1x128xf32, #tpu.memory_space<vmem>>, %arg4: memref<7x128x128xbf16, #tpu.memory_space<vmem>>, %arg5: memref<7x1x128xf32, #tpu.memory_space<vmem>>, %arg6: memref<2x128xf32, #tpu.memory_space<vmem>>, %arg7: memref<1x2xf32, #tpu.memory_space<vmem>>, %arg8: memref<56x2xf32, #tpu.memory_space<vmem>>) attributes {dimension_semantics = [#tpu.dimension_semantics<parallel>], iteration_bounds = array<i64: 2>, scalar_prefetch = 0 : i64, scratch_operands = 0 : i64, tpu.core_type = #tpu.core_type<tc>, window_params = [{transform_indices = @transform_0, window_bounds = array<i64: 56, 4>}, {pipeline_mode = #tpu.pipeline_mode<synchronous>, transform_indices = @transform_1, window_bounds = array<i64: 4, 128>}, {pipeline_mode = #tpu.pipeline_mode<synchronous>, transform_indices = @transform_2, window_bounds = array<i64: 1, 128>}, {pipeline_mode = #tpu.pipeline_mode<synchronous>, transform_indices = @transform_3, window_bounds = array<i64: 7, 128, 128>}, {pipeline_mode = #tpu.pipeline_mode<synchronous>, transform_indices = @transform_4, window_bounds = array<i64: 7, 1, 128>}, {pipeline_mode = #tpu.pipeline_mode<synchronous>, transform_indices = @transform_5, window_bounds = array<i64: 2, 128>}, {pipeline_mode = #tpu.pipeline_mode<synchronous>, transform_indices = @transform_6, window_bounds = array<i64: 1, 2>}, {transform_indices = @transform_7, window_bounds = array<i64: 56, 2>}]} {
    %c0 = arith.constant 0 : index
    %c0_0 = arith.constant 0 : index
    %0 = vector.load %arg1[%c0, %c0_0] : memref<56x4xf32, #tpu.memory_space<vmem>>, vector<56x4xf32>
    %1 = arith.truncf %0 : vector<56x4xf32> to vector<56x4xbf16>
    %c0_1 = arith.constant 0 : index
    %c0_2 = arith.constant 0 : index
    %2 = vector.load %arg2[%c0_1, %c0_2] : memref<4x128xbf16, #tpu.memory_space<vmem>>, vector<4x128xbf16>
    %cst = arith.constant dense<0.000000e+00> : vector<56x128xf32>
    %3 = tpu.matmul %1, %2, %cst {dimension_numbers = #tpu.dot_dimension_numbers<[1], [0], [0], [1], [0, 0, 1, 1], [], []>} : vector<56x4xbf16>, vector<4x128xbf16>, vector<56x128xf32> -> vector<56x128xf32>
    %c0_3 = arith.constant 0 : index
    %c0_4 = arith.constant 0 : index
    %4 = vector.load %arg3[%c0_3, %c0_4] : memref<1x128xf32, #tpu.memory_space<vmem>>, vector<1x128xf32>
    %5 = vector.broadcast %4 : vector<1x128xf32> to vector<56x128xf32>
    %6 = arith.addf %3, %5 : vector<56x128xf32>
    %7 = math.tanh %6 : vector<56x128xf32>
    %c0_5 = arith.constant 0 : index
    %c0_6 = arith.constant 0 : index
    %c0_7 = arith.constant 0 : index
    %8 = vector.load %arg4[%c0_5, %c0_6, %c0_7] : memref<7x128x128xbf16, #tpu.memory_space<vmem>>, vector<1x128x128xbf16>
    %9 = vector.shape_cast %8 : vector<1x128x128xbf16> to vector<128x128xbf16>
    %c0_8 = arith.constant 0 : index
    %c0_9 = arith.constant 0 : index
    %c0_10 = arith.constant 0 : index
    %10 = vector.load %arg5[%c0_8, %c0_9, %c0_10] : memref<7x1x128xf32, #tpu.memory_space<vmem>>, vector<1x1x128xf32>
    %11 = vector.shape_cast %10 : vector<1x1x128xf32> to vector<1x128xf32>
    %12 = arith.truncf %7 : vector<56x128xf32> to vector<56x128xbf16>
    %cst_11 = arith.constant dense<0.000000e+00> : vector<56x128xf32>
    %13 = tpu.matmul %12, %9, %cst_11 {dimension_numbers = #tpu.dot_dimension_numbers<[1], [0], [0], [1], [0, 0, 1, 1], [], []>} : vector<56x128xbf16>, vector<128x128xbf16>, vector<56x128xf32> -> vector<56x128xf32>
    %14 = vector.broadcast %11 : vector<1x128xf32> to vector<56x128xf32>
    %15 = arith.addf %13, %14 : vector<56x128xf32>
    %16 = math.tanh %15 : vector<56x128xf32>
    %17 = arith.addf %16, %7 : vector<56x128xf32>
    %c1 = arith.constant 1 : index
    %c0_12 = arith.constant 0 : index
    %c0_13 = arith.constant 0 : index
    %18 = vector.load %arg4[%c1, %c0_12, %c0_13] : memref<7x128x128xbf16, #tpu.memory_space<vmem>>, vector<1x128x128xbf16>
    %19 = vector.shape_cast %18 : vector<1x128x128xbf16> to vector<128x128xbf16>
    %c1_14 = arith.constant 1 : index
    %c0_15 = arith.constant 0 : index
    %c0_16 = arith.constant 0 : index
    %20 = vector.load %arg5[%c1_14, %c0_15, %c0_16] : memref<7x1x128xf32, #tpu.memory_space<vmem>>, vector<1x1x128xf32>
    %21 = vector.shape_cast %20 : vector<1x1x128xf32> to vector<1x128xf32>
    %22 = arith.truncf %17 : vector<56x128xf32> to vector<56x128xbf16>
    %cst_17 = arith.constant dense<0.000000e+00> : vector<56x128xf32>
    %23 = tpu.matmul %22, %19, %cst_17 {dimension_numbers = #tpu.dot_dimension_numbers<[1], [0], [0], [1], [0, 0, 1, 1], [], []>} : vector<56x128xbf16>, vector<128x128xbf16>, vector<56x128xf32> -> vector<56x128xf32>
    %24 = vector.broadcast %21 : vector<1x128xf32> to vector<56x128xf32>
    %25 = arith.addf %23, %24 : vector<56x128xf32>
    %26 = math.tanh %25 : vector<56x128xf32>
    %27 = arith.addf %26, %17 : vector<56x128xf32>
    %c2 = arith.constant 2 : index
    %c0_18 = arith.constant 0 : index
    %c0_19 = arith.constant 0 : index
    %28 = vector.load %arg4[%c2, %c0_18, %c0_19] : memref<7x128x128xbf16, #tpu.memory_space<vmem>>, vector<1x128x128xbf16>
    %29 = vector.shape_cast %28 : vector<1x128x128xbf16> to vector<128x128xbf16>
    %c2_20 = arith.constant 2 : index
    %c0_21 = arith.constant 0 : index
    %c0_22 = arith.constant 0 : index
    %30 = vector.load %arg5[%c2_20, %c0_21, %c0_22] : memref<7x1x128xf32, #tpu.memory_space<vmem>>, vector<1x1x128xf32>
    %31 = vector.shape_cast %30 : vector<1x1x128xf32> to vector<1x128xf32>
    %32 = arith.truncf %27 : vector<56x128xf32> to vector<56x128xbf16>
    %cst_23 = arith.constant dense<0.000000e+00> : vector<56x128xf32>
    %33 = tpu.matmul %32, %29, %cst_23 {dimension_numbers = #tpu.dot_dimension_numbers<[1], [0], [0], [1], [0, 0, 1, 1], [], []>} : vector<56x128xbf16>, vector<128x128xbf16>, vector<56x128xf32> -> vector<56x128xf32>
    %34 = vector.broadcast %31 : vector<1x128xf32> to vector<56x128xf32>
    %35 = arith.addf %33, %34 : vector<56x128xf32>
    %36 = math.tanh %35 : vector<56x128xf32>
    %37 = arith.addf %36, %27 : vector<56x128xf32>
    %c3 = arith.constant 3 : index
    %c0_24 = arith.constant 0 : index
    %c0_25 = arith.constant 0 : index
    %38 = vector.load %arg4[%c3, %c0_24, %c0_25] : memref<7x128x128xbf16, #tpu.memory_space<vmem>>, vector<1x128x128xbf16>
    %39 = vector.shape_cast %38 : vector<1x128x128xbf16> to vector<128x128xbf16>
    %c3_26 = arith.constant 3 : index
    %c0_27 = arith.constant 0 : index
    %c0_28 = arith.constant 0 : index
    %40 = vector.load %arg5[%c3_26, %c0_27, %c0_28] : memref<7x1x128xf32, #tpu.memory_space<vmem>>, vector<1x1x128xf32>
    %41 = vector.shape_cast %40 : vector<1x1x128xf32> to vector<1x128xf32>
    %42 = arith.truncf %37 : vector<56x128xf32> to vector<56x128xbf16>
    %cst_29 = arith.constant dense<0.000000e+00> : vector<56x128xf32>
    %43 = tpu.matmul %42, %39, %cst_29 {dimension_numbers = #tpu.dot_dimension_numbers<[1], [0], [0], [1], [0, 0, 1, 1], [], []>} : vector<56x128xbf16>, vector<128x128xbf16>, vector<56x128xf32> -> vector<56x128xf32>
    %44 = vector.broadcast %41 : vector<1x128xf32> to vector<56x128xf32>
    %45 = arith.addf %43, %44 : vector<56x128xf32>
    %46 = math.tanh %45 : vector<56x128xf32>
    %47 = arith.addf %46, %37 : vector<56x128xf32>
    %c4 = arith.constant 4 : index
    %c0_30 = arith.constant 0 : index
    %c0_31 = arith.constant 0 : index
    %48 = vector.load %arg4[%c4, %c0_30, %c0_31] : memref<7x128x128xbf16, #tpu.memory_space<vmem>>, vector<1x128x128xbf16>
    %49 = vector.shape_cast %48 : vector<1x128x128xbf16> to vector<128x128xbf16>
    %c4_32 = arith.constant 4 : index
    %c0_33 = arith.constant 0 : index
    %c0_34 = arith.constant 0 : index
    %50 = vector.load %arg5[%c4_32, %c0_33, %c0_34] : memref<7x1x128xf32, #tpu.memory_space<vmem>>, vector<1x1x128xf32>
    %51 = vector.shape_cast %50 : vector<1x1x128xf32> to vector<1x128xf32>
    %52 = arith.truncf %47 : vector<56x128xf32> to vector<56x128xbf16>
    %cst_35 = arith.constant dense<0.000000e+00> : vector<56x128xf32>
    %53 = tpu.matmul %52, %49, %cst_35 {dimension_numbers = #tpu.dot_dimension_numbers<[1], [0], [0], [1], [0, 0, 1, 1], [], []>} : vector<56x128xbf16>, vector<128x128xbf16>, vector<56x128xf32> -> vector<56x128xf32>
    %54 = vector.broadcast %51 : vector<1x128xf32> to vector<56x128xf32>
    %55 = arith.addf %53, %54 : vector<56x128xf32>
    %56 = math.tanh %55 : vector<56x128xf32>
    %57 = arith.addf %56, %47 : vector<56x128xf32>
    %c5 = arith.constant 5 : index
    %c0_36 = arith.constant 0 : index
    %c0_37 = arith.constant 0 : index
    %58 = vector.load %arg4[%c5, %c0_36, %c0_37] : memref<7x128x128xbf16, #tpu.memory_space<vmem>>, vector<1x128x128xbf16>
    %59 = vector.shape_cast %58 : vector<1x128x128xbf16> to vector<128x128xbf16>
    %c5_38 = arith.constant 5 : index
    %c0_39 = arith.constant 0 : index
    %c0_40 = arith.constant 0 : index
    %60 = vector.load %arg5[%c5_38, %c0_39, %c0_40] : memref<7x1x128xf32, #tpu.memory_space<vmem>>, vector<1x1x128xf32>
    %61 = vector.shape_cast %60 : vector<1x1x128xf32> to vector<1x128xf32>
    %62 = arith.truncf %57 : vector<56x128xf32> to vector<56x128xbf16>
    %cst_41 = arith.constant dense<0.000000e+00> : vector<56x128xf32>
    %63 = tpu.matmul %62, %59, %cst_41 {dimension_numbers = #tpu.dot_dimension_numbers<[1], [0], [0], [1], [0, 0, 1, 1], [], []>} : vector<56x128xbf16>, vector<128x128xbf16>, vector<56x128xf32> -> vector<56x128xf32>
    %64 = vector.broadcast %61 : vector<1x128xf32> to vector<56x128xf32>
    %65 = arith.addf %63, %64 : vector<56x128xf32>
    %66 = math.tanh %65 : vector<56x128xf32>
    %67 = arith.addf %66, %57 : vector<56x128xf32>
    %c6 = arith.constant 6 : index
    %c0_42 = arith.constant 0 : index
    %c0_43 = arith.constant 0 : index
    %68 = vector.load %arg4[%c6, %c0_42, %c0_43] : memref<7x128x128xbf16, #tpu.memory_space<vmem>>, vector<1x128x128xbf16>
    %69 = vector.shape_cast %68 : vector<1x128x128xbf16> to vector<128x128xbf16>
    %c6_44 = arith.constant 6 : index
    %c0_45 = arith.constant 0 : index
    %c0_46 = arith.constant 0 : index
    %70 = vector.load %arg5[%c6_44, %c0_45, %c0_46] : memref<7x1x128xf32, #tpu.memory_space<vmem>>, vector<1x1x128xf32>
    %71 = vector.shape_cast %70 : vector<1x1x128xf32> to vector<1x128xf32>
    %72 = arith.truncf %67 : vector<56x128xf32> to vector<56x128xbf16>
    %cst_47 = arith.constant dense<0.000000e+00> : vector<56x128xf32>
    %73 = tpu.matmul %72, %69, %cst_47 {dimension_numbers = #tpu.dot_dimension_numbers<[1], [0], [0], [1], [0, 0, 1, 1], [], []>} : vector<56x128xbf16>, vector<128x128xbf16>, vector<56x128xf32> -> vector<56x128xf32>
    %74 = vector.broadcast %71 : vector<1x128xf32> to vector<56x128xf32>
    %75 = arith.addf %73, %74 : vector<56x128xf32>
    %76 = math.tanh %75 : vector<56x128xf32>
    %77 = arith.addf %76, %67 : vector<56x128xf32>
    %c0_48 = arith.constant 0 : index
    %c0_49 = arith.constant 0 : index
    %78 = vector.load %arg6[%c0_48, %c0_49] : memref<2x128xf32, #tpu.memory_space<vmem>>, vector<1x128xf32>
    %79 = vector.broadcast %78 : vector<1x128xf32> to vector<56x128xf32>
    %80 = arith.mulf %77, %79 : vector<56x128xf32>
    %cst_50 = arith.constant dense<0.000000e+00> : vector<56xf32>
    %81 = vector.multi_reduction <add>, %80, %cst_50 [1] : vector<56x128xf32> to vector<56xf32>
    %82 = vector.shape_cast %81 : vector<56xf32> to vector<56x1xf32>
    %c1_51 = arith.constant 1 : index
    %c0_52 = arith.constant 0 : index
    %83 = vector.load %arg6[%c1_51, %c0_52] : memref<2x128xf32, #tpu.memory_space<vmem>>, vector<1x128xf32>
    %84 = vector.broadcast %83 : vector<1x128xf32> to vector<56x128xf32>
    %85 = arith.mulf %77, %84 : vector<56x128xf32>
    %cst_53 = arith.constant dense<0.000000e+00> : vector<56xf32>
    %86 = vector.multi_reduction <add>, %85, %cst_53 [1] : vector<56x128xf32> to vector<56xf32>
    %87 = vector.shape_cast %86 : vector<56xf32> to vector<56x1xf32>
    %88 = tpu.concatenate %82, %87 in 1 : vector<56x1xf32>, vector<56x1xf32> -> vector<56x2xf32>
    %c0_54 = arith.constant 0 : index
    %c0_55 = arith.constant 0 : index
    %89 = vector.load %arg7[%c0_54, %c0_55] : memref<1x2xf32, #tpu.memory_space<vmem>>, vector<1x2xf32>
    %90 = vector.broadcast %89 : vector<1x2xf32> to vector<56x2xf32>
    %91 = arith.addf %88, %90 : vector<56x2xf32>
    %c0_56 = arith.constant 0 : index
    %c0_57 = arith.constant 0 : index
    %92 = vector.load %arg8[%c0_56, %c0_57] : memref<56x2xf32, #tpu.memory_space<vmem>>, vector<56x2xf32>
    tpu.vector_store %arg8[%c0_56, %c0_57], %91 {strides = array<i32>} : memref<56x2xf32, #tpu.memory_space<vmem>>, vector<56x2xf32>,
    return
  }
  func.func @transform_0(%arg0: i32) -> (i32, i32) {
    %c0_i32 = arith.constant 0 : i32
    %c0_i32_0 = arith.constant 0 : i32
    return %arg0, %c0_i32 : i32, i32
  }
  func.func @transform_1(%arg0: i32) -> (i32, i32) {
    %c0_i32 = arith.constant 0 : i32
    %c0_i32_0 = arith.constant 0 : i32
    %c0_i32_1 = arith.constant 0 : i32
    return %c0_i32, %c0_i32_0 : i32, i32
  }
  func.func @transform_2(%arg0: i32) -> (i32, i32) {
    %c0_i32 = arith.constant 0 : i32
    %c0_i32_0 = arith.constant 0 : i32
    %c0_i32_1 = arith.constant 0 : i32
    return %c0_i32, %c0_i32_0 : i32, i32
  }
  func.func @transform_3(%arg0: i32) -> (i32, i32, i32) {
    %c0_i32 = arith.constant 0 : i32
    %c0_i32_0 = arith.constant 0 : i32
    %c0_i32_1 = arith.constant 0 : i32
    %c0_i32_2 = arith.constant 0 : i32
    return %c0_i32, %c0_i32_0, %c0_i32_1 : i32, i32, i32
  }
  func.func @transform_4(%arg0: i32) -> (i32, i32, i32) {
    %c0_i32 = arith.constant 0 : i32
    %c0_i32_0 = arith.constant 0 : i32
    %c0_i32_1 = arith.constant 0 : i32
    %c0_i32_2 = arith.constant 0 : i32
    return %c0_i32, %c0_i32_0, %c0_i32_1 : i32, i32, i32
  }
  func.func @transform_5(%arg0: i32) -> (i32, i32) {
    %c0_i32 = arith.constant 0 : i32
    %c0_i32_0 = arith.constant 0 : i32
    %c0_i32_1 = arith.constant 0 : i32
    return %c0_i32, %c0_i32_0 : i32, i32
  }
  func.func @transform_6(%arg0: i32) -> (i32, i32) {
    %c0_i32 = arith.constant 0 : i32
    %c0_i32_0 = arith.constant 0 : i32
    %c0_i32_1 = arith.constant 0 : i32
    return %c0_i32, %c0_i32_0 : i32, i32
  }
  func.func @transform_7(%arg0: i32) -> (i32, i32) {
    %c0_i32 = arith.constant 0 : i32
    %c0_i32_0 = arith.constant 0 : i32
    return %arg0, %c0_i32 : i32, i32
  }
}

</mosaic_0001>

<llo_original>
// kernel: u_net_deep_narrow_resnet_forward.1
$region0: #{u_net_deep_narrow_resnet_forward.1}
  #allocation0 [shape = 'u32[]', space=smem, size = 0x4, offset = 0x4, fixed_abs, tag = 'smem constant byte address 0x4 - core index']
  #allocation1 [shape = 'u32[144,128]{1,0:T(1,128)}', space=vmem, size = 0x12000, scoped, tag = 'internal scratch']
  %s0 = inlined_call_operand.vmem [shape: f32[112,4], index: 0, kind: input, shape index: {}]
  %s1 = inlined_call_operand.vmem [shape: bf16[4,128], index: 1, kind: input, shape index: {}]
  %s2 = inlined_call_operand.vmem [shape: f32[1,128], index: 2, kind: input, shape index: {}]
  %s3 = inlined_call_operand.hbm [shape: bf16[7,128,128], index: 3, kind: input, shape index: {}]
  %s4 = inlined_call_operand.vmem [shape: f32[7,1,128], index: 4, kind: input, shape index: {}]
  %s5 = inlined_call_operand.vmem [shape: f32[2,128], index: 5, kind: input, shape index: {}]
  %s6 = inlined_call_operand.vmem [shape: f32[1,2], index: 6, kind: input, shape index: {}]
  %s7 = inlined_call_operand.vmem [shape: f32[112,2], index: 7, kind: output, shape index: {}]
  %s8 = sld [smem:[#allocation0]]
  $region65: #{u_net_deep_narrow_resnet_forward.1} parent=0
    _
  %s10 = ssub.s32 1, %s8
  %s11 = scalar_select 0, %s10, %s8
  $region1: #{u_net_deep_narrow_resnet_forward.1} parent=0
    #allocation2 [shape = 'u8[229376]{0}', space=vmem, size = 0x38000, scoped, tag = 'input window, operand 3, single buffered']
    #allocation3 [shape = 's32[2]{0}', space=sflag, size = 0x8, scoped, tag = 'scoped memory for u_net_deep_narrow_resnet_forward.1']
    %12 = vsyncpa [#allocation3], 0
    loop: start=0, step=1, limit=4
    $region2: #{u_net_deep_narrow_resnet_forward.1} parent=1 // loop_pre_header
      _
    $region3: #{u_net_deep_narrow_resnet_forward.1} parent=1 // loop_header
      %s14 = sphi 0, %s18
      %p15 = scmp.ge.s32.totalorder %s14, 4
      %s24 = sphi 0, %s26
      %s27 = sphi 0, %s24
      %s28 = sphi 0, %s27
      %s44 = sphi 0, %s28
      %s48 = sphi 0, %s48
      %s50 = sphi 0, %s48
      %s51 = sphi 0, %s50
      %s65 = sphi 0, %s51
      %s69 = sphi 0, %s69
      %s71 = sphi 0, %s69
      %s72 = sphi 0, %s71
      %s86 = sphi 0, %s72
      %s90 = sphi 0, %s90
      %s92 = sphi 0, %s90
      %s93 = sphi 0, %s92
      %s107 = sphi 0, %s93
      %s111 = sphi 0, %s111
      %s113 = sphi 0, %s111
      %s114 = sphi 0, %s113
      %s128 = sphi 0, %s114
      %s132 = sphi 0, %s132
      %s134 = sphi 0, %s132
      %s135 = sphi 0, %s134
      %s149 = sphi 0, %s135
      %s153 = sphi 0, %s153
      %s155 = sphi 0, %s153
      %s156 = sphi 0, %s155
      %s170 = sphi 0, %s156
      %s176 = sphi 0, %s178
      %s179 = sphi 0, %s176
      %s180 = sphi 0, %s179
      %s196 = sphi 0, %s180
    $region4: #{u_net_deep_narrow_resnet_forward.1} parent=1 // loop_header_branch
      %17 = sbr.rel (%p15) target = $region8
    $region5: #{u_net_deep_narrow_resnet_forward.1} parent=1 // loop_body
      %s19 = ssub.s32 %s14, 1
      %s20 = ssub.s32 %s14, 2
      %s21 = sadd.s32 %s14, 1
      %s22 = ssub.s32 %s14, %s21
      %p23 = scmp.eq.s32.totalorder %s22, 0
      %s25 = sadd.s32 %s24, 1
      %s26 = scalar_select %p23, %s24, %s25
      %p29 = pneg %p23
      %p30 = scmp.eq.s32.totalorder %s14, 1
      %p31 = por %p29, %p30
      %p32 = scmp.ne.s32.totalorder %s24, %s27
      %p33 = scmp.eq.s32.totalorder %s14, 0
      %p34 = por %p32, %p33
      %p35 = scmp.ne.s32.totalorder %s24, %s27
      %p36 = scmp.eq.s32.totalorder %s19, 1
      %p37 = por %p35, %p36
      %p38 = scmp.ne.s32.totalorder %s27, %s28
      %p39 = scmp.eq.s32.totalorder %s19, 0
      %p40 = por %p38, %p39
      %p41 = scmp.ne.s32.totalorder %s27, %s28
      %p42 = scmp.eq.s32.totalorder %s20, 1
      %p43 = por %p41, %p42
      %p45 = scmp.ne.s32.totalorder %s28, %s44
      %p46 = scmp.eq.s32.totalorder %s20, 0
      %p47 = por %p45, %p46
      %s49 = sadd.s32 %s48, 1
      %p52 = scmp.eq.s32.totalorder %s14, 1
      %p53 = scmp.ne.s32.totalorder %s48, %s50
      %p54 = scmp.eq.s32.totalorder %s14, 0
      %p55 = por %p53, %p54
      %p56 = scmp.ne.s32.totalorder %s48, %s50
      %p57 = scmp.eq.s32.totalorder %s19, 1
      %p58 = por %p56, %p57
      %p59 = scmp.ne.s32.totalorder %s50, %s51
      %p60 = scmp.eq.s32.totalorder %s19, 0
      %p61 = por %p59, %p60
      %p62 = scmp.ne.s32.totalorder %s50, %s51
      %p63 = scmp.eq.s32.totalorder %s20, 1
      %p64 = por %p62, %p63
      %p66 = scmp.ne.s32.totalorder %s51, %s65
      %p67 = scmp.eq.s32.totalorder %s20, 0
      %p68 = por %p66, %p67
      %s70 = sadd.s32 %s69, 1
      %p73 = scmp.eq.s32.totalorder %s14, 1
      %p74 = scmp.ne.s32.totalorder %s69, %s71
      %p75 = scmp.eq.s32.totalorder %s14, 0
      %p76 = por %p74, %p75
      %p77 = scmp.ne.s32.totalorder %s69, %s71
      %p78 = scmp.eq.s32.totalorder %s19, 1
      %p79 = por %p77, %p78
      %p80 = scmp.ne.s32.totalorder %s71, %s72
      %p81 = scmp.eq.s32.totalorder %s19, 0
      %p82 = por %p80, %p81
      %p83 = scmp.ne.s32.totalorder %s71, %s72
      %p84 = scmp.eq.s32.totalorder %s20, 1
      %p85 = por %p83, %p84
      %p87 = scmp.ne.s32.totalorder %s72, %s86
      %p88 = scmp.eq.s32.totalorder %s20, 0
      %p89 = por %p87, %p88
      %s91 = sadd.s32 %s90, 1
      %p94 = scmp.eq.s32.totalorder %s14, 1
      %p95 = scmp.ne.s32.totalorder %s90, %s92
      %p96 = scmp.eq.s32.totalorder %s14, 0
      %p97 = por %p95, %p96
      %p98 = scmp.ne.s32.totalorder %s90, %s92
      %p99 = scmp.eq.s32.totalorder %s19, 1
      %p100 = por %p98, %p99
      %p101 = scmp.ne.s32.totalorder %s92, %s93
      %p102 = scmp.eq.s32.totalorder %s19, 0
      %p103 = por %p101, %p102
      %p104 = scmp.ne.s32.totalorder %s92, %s93
      %p105 = scmp.eq.s32.totalorder %s20, 1
      %p106 = por %p104, %p105
      %p108 = scmp.ne.s32.totalorder %s93, %s107
      %p109 = scmp.eq.s32.totalorder %s20, 0
      %p110 = por %p108, %p109
      %s112 = sadd.s32 %s111, 1
      %p115 = scmp.eq.s32.totalorder %s14, 1
      %p116 = scmp.ne.s32.totalorder %s111, %s113
      %p117 = scmp.eq.s32.totalorder %s14, 0
      %p118 = por %p116, %p117
      %p119 = scmp.ne.s32.totalorder %s111, %s113
      %p120 = scmp.eq.s32.totalorder %s19, 1
      %p121 = por %p119, %p120
      %p122 = scmp.ne.s32.totalorder %s113, %s114
      %p123 = scmp.eq.s32.totalorder %s19, 0
      %p124 = por %p122, %p123
      %p125 = scmp.ne.s32.totalorder %s113, %s114
      %p126 = scmp.eq.s32.totalorder %s20, 1
      %p127 = por %p125, %p126
      %p129 = scmp.ne.s32.totalorder %s114, %s128
      %p130 = scmp.eq.s32.totalorder %s20, 0
      %p131 = por %p129, %p130
      %s133 = sadd.s32 %s132, 1
      %p136 = scmp.eq.s32.totalorder %s14, 1
      %p137 = scmp.ne.s32.totalorder %s132, %s134
      %p138 = scmp.eq.s32.totalorder %s14, 0
      %p139 = por %p137, %p138
      %p140 = scmp.ne.s32.totalorder %s132, %s134
      %p141 = scmp.eq.s32.totalorder %s19, 1
      %p142 = por %p140, %p141
      %p143 = scmp.ne.s32.totalorder %s134, %s135
      %p144 = scmp.eq.s32.totalorder %s19, 0
      %p145 = por %p143, %p144
      %p146 = scmp.ne.s32.totalorder %s134, %s135
      %p147 = scmp.eq.s32.totalorder %s20, 1
      %p148 = por %p146, %p147
      %p150 = scmp.ne.s32.totalorder %s135, %s149
      %p151 = scmp.eq.s32.totalorder %s20, 0
      %p152 = por %p150, %p151
      %s154 = sadd.s32 %s153, 1
      %p157 = scmp.eq.s32.totalorder %s14, 1
      %p158 = scmp.ne.s32.totalorder %s153, %s155
      %p159 = scmp.eq.s32.totalorder %s14, 0
      %p160 = por %p158, %p159
      %p161 = scmp.ne.s32.totalorder %s153, %s155
      %p162 = scmp.eq.s32.totalorder %s19, 1
      %p163 = por %p161, %p162
      %p164 = scmp.ne.s32.totalorder %s155, %s156
      %p165 = scmp.eq.s32.totalorder %s19, 0
      %p166 = por %p164, %p165
      %p167 = scmp.ne.s32.totalorder %s155, %s156
      %p168 = scmp.eq.s32.totalorder %s20, 1
      %p169 = por %p167, %p168
      %p171 = scmp.ne.s32.totalorder %s156, %s170
      %p172 = scmp.eq.s32.totalorder %s20, 0
      %p173 = por %p171, %p172
      %s174 = ssub.s32 %s14, %s21
      %p175 = scmp.eq.s32.totalorder %s174, 0
      %s177 = sadd.s32 %s176, 1
      %s178 = scalar_select %p175, %s176, %s177
      %p181 = pneg %p175
      %p182 = scmp.eq.s32.totalorder %s14, 1
      %p183 = por %p181, %p182
      %p184 = scmp.ne.s32.totalorder %s176, %s179
      %p185 = scmp.eq.s32.totalorder %s14, 0
      %p186 = por %p184, %p185
      %p187 = scmp.ne.s32.totalorder %s176, %s179
      %p188 = scmp.eq.s32.totalorder %s19, 1
      %p189 = por %p187, %p188
      %p190 = scmp.ne.s32.totalorder %s179, %s180
      %p191 = scmp.eq.s32.totalorder %s19, 0
      %p192 = por %p190, %p191
      %p193 = scmp.ne.s32.totalorder %s179, %s180
      %p194 = scmp.eq.s32.totalorder %s20, 1
      %p195 = por %p193, %p194
      %p197 = scmp.ne.s32.totalorder %s180, %s196
      %p198 = scmp.eq.s32.totalorder %s20, 0
      %p199 = por %p197, %p198
      %p200 = scmp.le.s32.totalorder 1, %s14
      %p201 = scmp.lt.s32.totalorder %s14, 3
      %p202 = pnand %p200, %p201
      %p203 = pneg %p202
      // Predicated region
      $region9: #{u_net_deep_narrow_resnet_forward.1} parent=5 // pred_check
        _
      $region10: #{u_net_deep_narrow_resnet_forward.1} parent=5 // pred_check_branch
        %205 = sbr.rel (%p202) target = $region12
      $region11: #{u_net_deep_narrow_resnet_forward.1} parent=5 // pred_region
        %s206 = ssub.s32 %s14, 1
        // Predicated region
        $region13: #{u_net_deep_narrow_resnet_forward.1} parent=11 // pred_check
          %p207 = pneg %p61
        $region14: #{u_net_deep_narrow_resnet_forward.1} parent=11 // pred_check_branch
          %209 = sbr.rel (%p207) target = $region16
        $region15: #{u_net_deep_narrow_resnet_forward.1} parent=11 // pred_region
          _
        $region16: #{u_net_deep_narrow_resnet_forward.1} parent=11 // pred_fallthru
          _
        // Predicated region
        $region17: #{u_net_deep_narrow_resnet_forward.1} parent=11 // pred_check
          %p210 = pneg %p82
        $region18: #{u_net_deep_narrow_resnet_forward.1} parent=11 // pred_check_branch
          %212 = sbr.rel (%p210) target = $region20
        $region19: #{u_net_deep_narrow_resnet_forward.1} parent=11 // pred_region
          _
        $region20: #{u_net_deep_narrow_resnet_forward.1} parent=11 // pred_fallthru
          _
        // Predicated region
        $region21: #{u_net_deep_narrow_resnet_forward.1} parent=11 // pred_check
          %p213 = pneg %p103
        $region22: #{u_net_deep_narrow_resnet_forward.1} parent=11 // pred_check_branch
          %215 = sbr.rel (%p213) target = $region24
        $region23: #{u_net_deep_narrow_resnet_forward.1} parent=11 // pred_region
          %s217 = ssub.s32 7168, 7168
          %218 = vsyncadd [#allocation3], %s217
          %s219 = sshll.u32 [#allocation2], 4
          %s220 = int_to_ptr.vmem [resolvable:$true] %s219
          %225 = dma.hbm_to_vmem [thread:$0]  %s3, 7168, %s220, [#allocation3], 64, 64, 4
        $region24: #{u_net_deep_narrow_resnet_forward.1} parent=11 // pred_fallthru
          _
        // Predicated region
        $region25: #{u_net_deep_narrow_resnet_forward.1} parent=11 // pred_check
          %p226 = pneg %p124
        $region26: #{u_net_deep_narrow_resnet_forward.1} parent=11 // pred_check_branch
          %228 = sbr.rel (%p226) target = $region28
        $region27: #{u_net_deep_narrow_resnet_forward.1} parent=11 // pred_region
          _
        $region28: #{u_net_deep_narrow_resnet_forward.1} parent=11 // pred_fallthru
          _
        // Predicated region
        $region29: #{u_net_deep_narrow_resnet_forward.1} parent=11 // pred_check
          %p229 = pneg %p145
        $region30: #{u_net_deep_narrow_resnet_forward.1} parent=11 // pred_check_branch
          %231 = sbr.rel (%p229) target = $region32
        $region31: #{u_net_deep_narrow_resnet_forward.1} parent=11 // pred_region
          _
        $region32: #{u_net_deep_narrow_resnet_forward.1} parent=11 // pred_fallthru
          _
        // Predicated region
        $region33: #{u_net_deep_narrow_resnet_forward.1} parent=11 // pred_check
          %p232 = pneg %p166
        $region34: #{u_net_deep_narrow_resnet_forward.1} parent=11 // pred_check_branch
          %234 = sbr.rel (%p232) target = $region36
        $region35: #{u_net_deep_narrow_resnet_forward.1} parent=11 // pred_region
          _
        $region36: #{u_net_deep_narrow_resnet_forward.1} parent=11 // pred_fallthru
          _
      $region12: #{u_net_deep_narrow_resnet_forward.1} parent=5 // pred_fallthru
        _
      %p235 = scmp.lt.s32.totalorder %s14, 2
      // Predicated region
      $region37: #{u_net_deep_narrow_resnet_forward.1} parent=5 // pred_check
        %p236 = pneg %p235
      $region38: #{u_net_deep_narrow_resnet_forward.1} parent=5 // pred_check_branch
        %238 = sbr.rel (%p236) target = $region40
      $region39: #{u_net_deep_narrow_resnet_forward.1} parent=5 // pred_region
        // Predicated region
        $region41: #{u_net_deep_narrow_resnet_forward.1} parent=39 // pred_check
          %p239 = pneg %p34
        $region42: #{u_net_deep_narrow_resnet_forward.1} parent=39 // pred_check_branch
          %241 = sbr.rel (%p239) target = $region44
        $region43: #{u_net_deep_narrow_resnet_forward.1} parent=39 // pred_region
          %s242 = smul.u32 7, %s14
          %p243 = scmp.lt.s32.totalorder %s242, 13
          %s244 = scalar_select %p243, %s242, 13
          %s245 = smul.addr %s244, 8
          %s246 = scalar_lea.vmem %s0, %s245
          %s247 = smul.u32 7, %s14
        $region44: #{u_net_deep_narrow_resnet_forward.1} parent=39 // pred_fallthru
          _
      $region40: #{u_net_deep_narrow_resnet_forward.1} parent=5 // pred_fallthru
        _
      %p248 = scmp.le.s32.totalorder 1, %s14
      %p249 = scmp.lt.s32.totalorder %s14, 3
      %p250 = pnand %p248, %p249
      %p251 = pneg %p250
      // Predicated region
      $region45: #{u_net_deep_narrow_resnet_forward.1} parent=5 // pred_check
        _
      $region46: #{u_net_deep_narrow_resnet_forward.1} parent=5 // pred_check_branch
        %253 = sbr.rel (%p250) target = $region48
      $region47: #{u_net_deep_narrow_resnet_forward.1} parent=5 // pred_region
        %s254 = ssub.s32 %s14, 1
        // Predicated region
        $region49: #{u_net_deep_narrow_resnet_forward.1} parent=47 // pred_check
          %p255 = pneg %p103
        $region50: #{u_net_deep_narrow_resnet_forward.1} parent=47 // pred_check_branch
          %257 = sbr.rel (%p255) target = $region52
        $region51: #{u_net_deep_narrow_resnet_forward.1} parent=47 // pred_region
          %258 = dma.done [#allocation3], 7168
        $region52: #{u_net_deep_narrow_resnet_forward.1} parent=47 // pred_fallthru
          _
        %s259 = smul.u32 7, %s19
        %p260 = scmp.lt.s32.totalorder %s259, 13
        %s261 = scalar_select %p260, %s259, 13
        %s262 = smul.addr %s261, 8
        %s263 = scalar_lea.vmem %s0, %s262
        %p264 = pneg %p40
        %p265 = pneg %p37
        %p266 = pneg %p61
        %p267 = pneg %p58
        %p268 = pneg %p82
        %p269 = pneg %p79
        %p270 = pneg %p103
        %p271 = pneg %p100
        %p272 = pneg %p124
        %p273 = pneg %p121
        %p274 = pneg %p145
        %p275 = pneg %p142
        %p276 = pneg %p166
        %p277 = pneg %p163
        %p278 = pneg %p192
        %p279 = pneg %p189
        %s280 = smul.u32 7, %s19
        %p281 = scmp.lt.s32.totalorder %s280, 13
        %s282 = scalar_select %p281, %s280, 13
        %s283 = smul.addr %s282, 8
        %s284 = scalar_lea.vmem %s7, %s283
        %s285 = smul.u32 7, %s19
        %p286 = scmp.lt.s32.totalorder %s285, 13
        %s287 = scalar_select %p286, %s285, 13
        %s288 = smul.addr %s287, 8
        %s289 = scalar_lea.vmem %s0, %s288
        %s290 = smul.u32 7, %s19
        %s291 = smul.u32 7, %s19
        %p292 = scmp.lt.s32.totalorder %s291, 13
        %s293 = scalar_select %p292, %s291, 13
        %s294 = smul.addr %s293, 8
        %s295 = scalar_lea.vmem %s7, %s294
        %s296 = smul.u32 7, %s19
        %v298 = vld [vmem:[%s289] sm:$0xff]
        %v299 = vld [vmem:[%s289 + $0x8] sm:$0xff]
        %v300 = vld [vmem:[%s289 + $0x10] sm:$0xff]
        %v301 = vld [vmem:[%s289 + $0x18] sm:$0xff]
        %v302 = vld [vmem:[%s289 + $0x20] sm:$0xff]
        %v303 = vld [vmem:[%s289 + $0x28] sm:$0xff]
        %v304 = vld [vmem:[%s289 + $0x30] sm:$0xff]
        %v305 = vpack.c.bf16 %v299, %v298
        %v306 = vpack.c.bf16 %v301, %v300
        %v307 = vpack.c.bf16 %v303, %v302
        %v308 = vpack.c.bf16 %v304, %v304
        %v309 = vld [vmem:[%s1] sm:$0x3]
        %v310 = vld [vmem:[%s2] sm:$0x1]
        %v312 = vlaneseq
        %v313 = vshrl.u32 %v312, 7
        %v314 = vsub.s32 0, %v313
        %v315 = vrot.slane %v310, %v314
        %vm317 = vcmask 31744
        %v319 = vsel %vm317, %v305, 0
        %v322 = vsel %vm317, %v306, 0
        %v325 = vsel %vm317, %v307, 0
        %v328 = vsel %vm317, %v308, 0
        %vm330 = vcmask 1041408
        %v332 = vsel %vm330, %v309, 0
        %334 = vmatprep.subr.bf16.mxu0 0
        %335 = vmatpush1.bf16.msra.mxu0 %v332
        %336 = vmatprep.subr.bf16.mxu0 0
        %337 = vmatpush1.bf16.msra.mxu0 0
        %338 = vmatprep.subr.bf16.mxu0 0
        %339 = vmatpush1.bf16.msra.mxu0 0
        %340 = vmatprep.subr.bf16.mxu0 0
        %341 = vmatpush1.bf16.msra.mxu0 0
        %342 = vmatprep.subr.bf16.mxu0 0
        %343 = vmatpush1.bf16.msra.mxu0 0
        %344 = vmatprep.subr.bf16.mxu0 0
        %345 = vmatpush1.bf16.msra.mxu0 0
        %346 = vmatprep.subr.bf16.mxu0 0
        %347 = vmatpush1.bf16.msra.mxu0 0
        %348 = vmatprep.subr.bf16.mxu0 0
        %349 = vmatpush1.bf16.msra.mxu0 0
        %350 = vmatprep.subr.bf16.mxu0 0
        %351 = vmatpush1.bf16.msra.mxu0 0
        %352 = vmatprep.subr.bf16.mxu0 0
        %353 = vmatpush1.bf16.msra.mxu0 0
        %354 = vmatprep.subr.bf16.mxu0 0
        %355 = vmatpush1.bf16.msra.mxu0 0
        %356 = vmatprep.subr.bf16.mxu0 0
        %357 = vmatpush1.bf16.msra.mxu0 0
        %358 = vmatprep.subr.bf16.mxu0 0
        %359 = vmatpush1.bf16.msra.mxu0 0
        %360 = vmatprep.subr.bf16.mxu0 0
        %361 = vmatpush1.bf16.msra.mxu0 0
        %362 = vmatprep.subr.bf16.mxu0 0
        %363 = vmatpush1.bf16.msra.mxu0 0
        %364 = vmatprep.subr.bf16.mxu0 0
        %365 = vmatpush1.bf16.msra.mxu0 0
        %366 = vmatprep.mubr.bf16.mxu0 0
        %367 = vmatmul.mubr.bf16.gmra.mrb[0].mxu0 %v319
        %v368 = vpop.f32.mrb[0].mxu0
        %v369 = vadd.f32 %v315, %v368
        %v370 = vpop.f32.mrb[0].mxu0
        %v371 = vpop.f32.mrb[0].mxu0
        %v372 = vadd.f32 %v315, %v371
        %v373 = vpop.f32.mrb[0].mxu0
        %374 = vmatprep.mubr.bf16.mxu0 0
        %375 = vmatmul.mubr.bf16.gmra.mrb[0].mxu0 %v322
        %v376 = vpop.f32.mrb[0].mxu0
        %v377 = vadd.f32 %v315, %v376
        %v378 = vpop.f32.mrb[0].mxu0
        %v379 = vpop.f32.mrb[0].mxu0
        %v380 = vadd.f32 %v315, %v379
        %v381 = vpop.f32.mrb[0].mxu0
        %382 = vmatprep.mubr.bf16.mxu0 0
        %383 = vmatmul.mubr.bf16.gmra.mrb[0].mxu0 %v325
        %v384 = vpop.f32.mrb[0].mxu0
        %v385 = vadd.f32 %v315, %v384
        %v386 = vpop.f32.mrb[0].mxu0
        %v387 = vpop.f32.mrb[0].mxu0
        %v388 = vadd.f32 %v315, %v387
        %v389 = vpop.f32.mrb[0].mxu0
        %390 = vmatprep.mubr.bf16.mxu0 0
        %391 = vmatmul.mubr.bf16.gmra.mrb[0].mxu0 %v328
        %v392 = vpop.f32.mrb[0].mxu0
        %v393 = vadd.f32 %v315, %v392
        %v394 = vpop.f32.mrb[0].mxu0
        %v395 = vpop.f32.mrb[0].mxu0
        %v396 = vpop.f32.mrb[0].mxu0
        %397 = vdwg.mxu0
        %v398 = vtanh.pop %v369
        %v399 = vtanh.pop %v372
        %v400 = vtanh.pop %v377
        %v401 = vtanh.pop %v380
        %v402 = vtanh.pop %v385
        %v403 = vtanh.pop %v388
        %v404 = vtanh.pop %v393
        %v405 = vld [vmem:[#allocation2] sm:$0xf]
        %v406 = vld [vmem:[#allocation2 + $0x4] sm:$0xf]
        %v407 = vld [vmem:[#allocation2 + $0x8] sm:$0xf]
        %v408 = vld [vmem:[#allocation2 + $0xc] sm:$0xf]
        %v409 = vld [vmem:[#allocation2 + $0x10] sm:$0xf]
        %v410 = vld [vmem:[#allocation2 + $0x14] sm:$0xf]
        %v411 = vld [vmem:[#allocation2 + $0x18] sm:$0xf]
        %v412 = vld [vmem:[#allocation2 + $0x1c] sm:$0xf]
        %v413 = vld [vmem:[#allocation2 + $0x20] sm:$0xf]
        %v414 = vld [vmem:[#allocation2 + $0x24] sm:$0xf]
        %v415 = vld [vmem:[#allocation2 + $0x28] sm:$0xf]
        %v416 = vld [vmem:[#allocation2 + $0x2c] sm:$0xf]
        %v417 = vld [vmem:[#allocation2 + $0x30] sm:$0xf]
        %v418 = vld [vmem:[#allocation2 + $0x34] sm:$0xf]
        %v419 = vld [vmem:[#allocation2 + $0x38] sm:$0xf]
        %v420 = vld [vmem:[#allocation2 + $0x3c] sm:$0xf]
        %v421 = vld [vmem:[%s4] sm:$0x1]
        %v422 = vpack.c.bf16 %v399, %v398
        %v423 = vpack.c.bf16 %v401, %v400
        %v424 = vpack.c.bf16 %v403, %v402
        %v425 = vpack.c.bf16 %v404, %v404
        %v427 = vlaneseq
        %v428 = vshrl.u32 %v427, 7
        %v429 = vsub.s32 0, %v428
        %v430 = vrot.slane %v421, %v429
        %v448 = vunpack.c.l.b16 %v405
        %v449 = vunpack.c.l.b16 %v406
        %v450 = vunpack.c.l.b16 %v407
        %v451 = vunpack.c.l.b16 %v408
        %v452 = vunpack.c.l.b16 %v409
        %v453 = vunpack.c.l.b16 %v410
        %v454 = vunpack.c.l.b16 %v411
        %v455 = vunpack.c.l.b16 %v412
        %v456 = vunpack.c.l.b16 %v413
        %v457 = vunpack.c.l.b16 %v414
        %v458 = vunpack.c.l.b16 %v415
        %v459 = vunpack.c.l.b16 %v416
        %v460 = vunpack.c.l.b16 %v417
        %v461 = vunpack.c.l.b16 %v418
        %v462 = vunpack.c.l.b16 %v419
        %v463 = vunpack.c.l.b16 %v420
        %v464 = vpack.c.b16 %v449, %v448
        %v465 = vpack.c.b16 %v451, %v450
        %v466 = vpack.c.b16 %v453, %v452
        %v467 = vpack.c.b16 %v455, %v454
        %v468 = vpack.c.b16 %v457, %v456
        %v469 = vpack.c.b16 %v459, %v458
        %v470 = vpack.c.b16 %v461, %v460
        %v471 = vpack.c.b16 %v463, %v462
        %480 = vmatprep.subr.bf16.mxu0 0
        %481 = vmatpush1.bf16.msra.mxu0 %v464
        %482 = vmatprep.subr.bf16.mxu0 0
        %483 = vmatpush1.bf16.msra.mxu0 %v465
        %484 = vmatprep.subr.bf16.mxu0 0
        %485 = vmatpush1.bf16.msra.mxu0 %v466
        %486 = vmatprep.subr.bf16.mxu0 0
        %487 = vmatpush1.bf16.msra.mxu0 %v467
        %488 = vmatprep.subr.bf16.mxu0 0
        %489 = vmatpush1.bf16.msra.mxu0 %v468
        %490 = vmatprep.subr.bf16.mxu0 0
        %491 = vmatpush1.bf16.msra.mxu0 %v469
        %492 = vmatprep.subr.bf16.mxu0 0
        %493 = vmatpush1.bf16.msra.mxu0 %v470
        %494 = vmatprep.subr.bf16.mxu0 0
        %495 = vmatpush1.bf16.msra.mxu0 %v471
        %496 = vmatprep.subr.bf16.mxu0 0
        %497 = vmatpush1.bf16.msra.mxu0 0
        %498 = vmatprep.subr.bf16.mxu0 0
        %499 = vmatpush1.bf16.msra.mxu0 0
        %500 = vmatprep.subr.bf16.mxu0 0
        %501 = vmatpush1.bf16.msra.mxu0 0
        %502 = vmatprep.subr.bf16.mxu0 0
        %503 = vmatpush1.bf16.msra.mxu0 0
        %504 = vmatprep.subr.bf16.mxu0 0
        %505 = vmatpush1.bf16.msra.mxu0 0
        %506 = vmatprep.subr.bf16.mxu0 0
        %507 = vmatpush1.bf16.msra.mxu0 0
        %508 = vmatprep.subr.bf16.mxu0 0
        %509 = vmatpush1.bf16.msra.mxu0 0
        %510 = vmatprep.subr.bf16.mxu0 0
        %511 = vmatpush1.bf16.msra.mxu0 0
        %512 = vmatprep.mubr.bf16.mxu0 0
        %513 = vmatmul.mubr.bf16.gmra.mrb[0].mxu0 %v422
        %v514 = vpop.f32.mrb[0].mxu0
        %v515 = vadd.f32 %v430, %v514
        %v516 = vpop.f32.mrb[0].mxu0
        %v517 = vpop.f32.mrb[0].mxu0
        %v518 = vadd.f32 %v430, %v517
        %v519 = vpop.f32.mrb[0].mxu0
        %520 = vmatprep.mubr.bf16.mxu0 0
        %521 = vmatmul.mubr.bf16.gmra.mrb[0].mxu0 %v423
        %v522 = vpop.f32.mrb[0].mxu0
        %v523 = vadd.f32 %v430, %v522
        %v524 = vpop.f32.mrb[0].mxu0
        %v525 = vpop.f32.mrb[0].mxu0
        %v526 = vadd.f32 %v430, %v525
        %v527 = vpop.f32.mrb[0].mxu0
        %528 = vmatprep.mubr.bf16.mxu0 0
        %529 = vmatmul.mubr.bf16.gmra.mrb[0].mxu0 %v424
        %v530 = vpop.f32.mrb[0].mxu0
        %v531 = vadd.f32 %v430, %v530
        %v532 = vpop.f32.mrb[0].mxu0
        %v533 = vpop.f32.mrb[0].mxu0
        %v534 = vadd.f32 %v430, %v533
        %v535 = vpop.f32.mrb[0].mxu0
        %536 = vmatprep.mubr.bf16.mxu0 0
        %537 = vmatmul.mubr.bf16.gmra.mrb[0].mxu0 %v425
        %v538 = vpop.f32.mrb[0].mxu0
        %v539 = vadd.f32 %v430, %v538
        %v540 = vpop.f32.mrb[0].mxu0
        %v541 = vpop.f32.mrb[0].mxu0
        %v542 = vpop.f32.mrb[0].mxu0
        %543 = vdwg.mxu0
        %v544 = vtanh.pop %v515
        %v545 = vtanh.pop %v518
        %v546 = vtanh.pop %v523
        %v547 = vtanh.pop %v526
        %v548 = vtanh.pop %v531
        %v549 = vtanh.pop %v534
        %v550 = vtanh.pop %v539
        %v551 = vadd.f32 %v544, %v398
        %v552 = vadd.f32 %v545, %v399
        %v553 = vadd.f32 %v546, %v400
        %v554 = vadd.f32 %v547, %v401
        %v555 = vadd.f32 %v548, %v402
        %v556 = vadd.f32 %v549, %v403
        %v557 = vadd.f32 %v550, %v404
        %s558 = scalar_lea.vmem [#allocation2], 64
        %v559 = vld [vmem:[%s558] sm:$0xf]
        %v560 = vld [vmem:[%s558 + $0x4] sm:$0xf]
        %v561 = vld [vmem:[%s558 + $0x8] sm:$0xf]
        %v562 = vld [vmem:[%s558 + $0xc] sm:$0xf]
        %v563 = vld [vmem:[%s558 + $0x10] sm:$0xf]
        %v564 = vld [vmem:[%s558 + $0x14] sm:$0xf]
        %v565 = vld [vmem:[%s558 + $0x18] sm:$0xf]
        %v566 = vld [vmem:[%s558 + $0x1c] sm:$0xf]
        %v567 = vld [vmem:[%s558 + $0x20] sm:$0xf]
        %v568 = vld [vmem:[%s558 + $0x24] sm:$0xf]
        %v569 = vld [vmem:[%s558 + $0x28] sm:$0xf]
        %v570 = vld [vmem:[%s558 + $0x2c] sm:$0xf]
        %v571 = vld [vmem:[%s558 + $0x30] sm:$0xf]
        %v572 = vld [vmem:[%s558 + $0x34] sm:$0xf]
        %v573 = vld [vmem:[%s558 + $0x38] sm:$0xf]
        %v574 = vld [vmem:[%s558 + $0x3c] sm:$0xf]
        %s575 = scalar_lea.vmem %s4, 1
        %v576 = vld [vmem:[%s575] sm:$0x1]
        %v577 = vpack.c.bf16 %v552, %v551
        %v578 = vpack.c.bf16 %v554, %v553
        %v579 = vpack.c.bf16 %v556, %v555
        %v580 = vpack.c.bf16 %v557, %v557
        %v582 = vlaneseq
        %v583 = vshrl.u32 %v582, 7
        %v584 = vsub.s32 0, %v583
        %v585 = vrot.slane %v576, %v584
        %v603 = vunpack.c.l.b16 %v559
        %v604 = vunpack.c.l.b16 %v560
        %v605 = vunpack.c.l.b16 %v561
        %v606 = vunpack.c.l.b16 %v562
        %v607 = vunpack.c.l.b16 %v563
        %v608 = vunpack.c.l.b16 %v564
        %v609 = vunpack.c.l.b16 %v565
        %v610 = vunpack.c.l.b16 %v566
        %v611 = vunpack.c.l.b16 %v567
        %v612 = vunpack.c.l.b16 %v568
        %v613 = vunpack.c.l.b16 %v569
        %v614 = vunpack.c.l.b16 %v570
        %v615 = vunpack.c.l.b16 %v571
        %v616 = vunpack.c.l.b16 %v572
        %v617 = vunpack.c.l.b16 %v573
        %v618 = vunpack.c.l.b16 %v574
        %v619 = vpack.c.b16 %v604, %v603
        %v620 = vpack.c.b16 %v606, %v605
        %v621 = vpack.c.b16 %v608, %v607
        %v622 = vpack.c.b16 %v610, %v609
        %v623 = vpack.c.b16 %v612, %v611
        %v624 = vpack.c.b16 %v614, %v613
        %v625 = vpack.c.b16 %v616, %v615
        %v626 = vpack.c.b16 %v618, %v617
        %635 = vmatprep.subr.bf16.mxu0 0
        %636 = vmatpush1.bf16.msra.mxu0 %v619
        %637 = vmatprep.subr.bf16.mxu0 0
        %638 = vmatpush1.bf16.msra.mxu0 %v620
        %639 = vmatprep.subr.bf16.mxu0 0
        %640 = vmatpush1.bf16.msra.mxu0 %v621
        %641 = vmatprep.subr.bf16.mxu0 0
        %642 = vmatpush1.bf16.msra.mxu0 %v622
        %643 = vmatprep.subr.bf16.mxu0 0
        %644 = vmatpush1.bf16.msra.mxu0 %v623
        %645 = vmatprep.subr.bf16.mxu0 0
        %646 = vmatpush1.bf16.msra.mxu0 %v624
        %647 = vmatprep.subr.bf16.mxu0 0
        %648 = vmatpush1.bf16.msra.mxu0 %v625
        %649 = vmatprep.subr.bf16.mxu0 0
        %650 = vmatpush1.bf16.msra.mxu0 %v626
        %651 = vmatprep.subr.bf16.mxu0 0
        %652 = vmatpush1.bf16.msra.mxu0 0
        %653 = vmatprep.subr.bf16.mxu0 0
        %654 = vmatpush1.bf16.msra.mxu0 0
        %655 = vmatprep.subr.bf16.mxu0 0
        %656 = vmatpush1.bf16.msra.mxu0 0
        %657 = vmatprep.subr.bf16.mxu0 0
        %658 = vmatpush1.bf16.msra.mxu0 0
        %659 = vmatprep.subr.bf16.mxu0 0
        %660 = vmatpush1.bf16.msra.mxu0 0
        %661 = vmatprep.subr.bf16.mxu0 0
        %662 = vmatpush1.bf16.msra.mxu0 0
        %663 = vmatprep.subr.bf16.mxu0 0
        %664 = vmatpush1.bf16.msra.mxu0 0
        %665 = vmatprep.subr.bf16.mxu0 0
        %666 = vmatpush1.bf16.msra.mxu0 0
        %667 = vmatprep.mubr.bf16.mxu0 0
        %668 = vmatmul.mubr.bf16.gmra.mrb[0].mxu0 %v577
        %v669 = vpop.f32.mrb[0].mxu0
        %v670 = vadd.f32 %v585, %v669
        %v671 = vpop.f32.mrb[0].mxu0
        %v672 = vpop.f32.mrb[0].mxu0
        %v673 = vadd.f32 %v585, %v672
        %v674 = vpop.f32.mrb[0].mxu0
        %675 = vmatprep.mubr.bf16.mxu0 0
        %676 = vmatmul.mubr.bf16.gmra.mrb[0].mxu0 %v578
        %v677 = vpop.f32.mrb[0].mxu0
        %v678 = vadd.f32 %v585, %v677
        %v679 = vpop.f32.mrb[0].mxu0
        %v680 = vpop.f32.mrb[0].mxu0
        %v681 = vadd.f32 %v585, %v680
        %v682 = vpop.f32.mrb[0].mxu0
        %683 = vmatprep.mubr.bf16.mxu0 0
        %684 = vmatmul.mubr.bf16.gmra.mrb[0].mxu0 %v579
        %v685 = vpop.f32.mrb[0].mxu0
        %v686 = vadd.f32 %v585, %v685
        %v687 = vpop.f32.mrb[0].mxu0
        %v688 = vpop.f32.mrb[0].mxu0
        %v689 = vadd.f32 %v585, %v688
        %v690 = vpop.f32.mrb[0].mxu0
        %691 = vmatprep.mubr.bf16.mxu0 0
        %692 = vmatmul.mubr.bf16.gmra.mrb[0].mxu0 %v580
        %v693 = vpop.f32.mrb[0].mxu0
        %v694 = vadd.f32 %v585, %v693
        %v695 = vpop.f32.mrb[0].mxu0
        %v696 = vpop.f32.mrb[0].mxu0
        %v697 = vpop.f32.mrb[0].mxu0
        %698 = vdwg.mxu0
        %v699 = vtanh.pop %v670
        %v700 = vtanh.pop %v673
        %v701 = vtanh.pop %v678
        %v702 = vtanh.pop %v681
        %v703 = vtanh.pop %v686
        %v704 = vtanh.pop %v689
        %v705 = vtanh.pop %v694
        %v706 = vadd.f32 %v699, %v551
        %v707 = vadd.f32 %v700, %v552
        %v708 = vadd.f32 %v701, %v553
        %v709 = vadd.f32 %v702, %v554
        %v710 = vadd.f32 %v703, %v555
        %v711 = vadd.f32 %v704, %v556
        %v712 = vadd.f32 %v705, %v557
        %s713 = scalar_lea.vmem [#allocation2], 128
        %v714 = vld [vmem:[%s713] sm:$0xf]
        %v715 = vld [vmem:[%s713 + $0x4] sm:$0xf]
        %v716 = vld [vmem:[%s713 + $0x8] sm:$0xf]
        %v717 = vld [vmem:[%s713 + $0xc] sm:$0xf]
        %v718 = vld [vmem:[%s713 + $0x10] sm:$0xf]
        %v719 = vld [vmem:[%s713 + $0x14] sm:$0xf]
        %v720 = vld [vmem:[%s713 + $0x18] sm:$0xf]
        %v721 = vld [vmem:[%s713 + $0x1c] sm:$0xf]
        %v722 = vld [vmem:[%s713 + $0x20] sm:$0xf]
        %v723 = vld [vmem:[%s713 + $0x24] sm:$0xf]
        %v724 = vld [vmem:[%s713 + $0x28] sm:$0xf]
        %v725 = vld [vmem:[%s713 + $0x2c] sm:$0xf]
        %v726 = vld [vmem:[%s713 + $0x30] sm:$0xf]
        %v727 = vld [vmem:[%s713 + $0x34] sm:$0xf]
        %v728 = vld [vmem:[%s713 + $0x38] sm:$0xf]
        %v729 = vld [vmem:[%s713 + $0x3c] sm:$0xf]
        %s730 = scalar_lea.vmem %s4, 2
        %v731 = vld [vmem:[%s730] sm:$0x1]
        %v732 = vpack.c.bf16 %v707, %v706
        %v733 = vpack.c.bf16 %v709, %v708
        %v734 = vpack.c.bf16 %v711, %v710
        %v735 = vpack.c.bf16 %v712, %v712
        %v737 = vlaneseq
        %v738 = vshrl.u32 %v737, 7
        %v739 = vsub.s32 0, %v738
        %v740 = vrot.slane %v731, %v739
        %v758 = vunpack.c.l.b16 %v714
        %v759 = vunpack.c.l.b16 %v715
        %v760 = vunpack.c.l.b16 %v716
        %v761 = vunpack.c.l.b16 %v717
        %v762 = vunpack.c.l.b16 %v718
        %v763 = vunpack.c.l.b16 %v719
        %v764 = vunpack.c.l.b16 %v720
        %v765 = vunpack.c.l.b16 %v721
        %v766 = vunpack.c.l.b16 %v722
        %v767 = vunpack.c.l.b16 %v723
        %v768 = vunpack.c.l.b16 %v724
        %v769 = vunpack.c.l.b16 %v725
        %v770 = vunpack.c.l.b16 %v726
        %v771 = vunpack.c.l.b16 %v727
        %v772 = vunpack.c.l.b16 %v728
        %v773 = vunpack.c.l.b16 %v729
        %v774 = vpack.c.b16 %v759, %v758
        %v775 = vpack.c.b16 %v761, %v760
        %v776 = vpack.c.b16 %v763, %v762
        %v777 = vpack.c.b16 %v765, %v764
        %v778 = vpack.c.b16 %v767, %v766
        %v779 = vpack.c.b16 %v769, %v768
        %v780 = vpack.c.b16 %v771, %v770
        %v781 = vpack.c.b16 %v773, %v772
        %790 = vmatprep.subr.bf16.mxu0 0
        %791 = vmatpush1.bf16.msra.mxu0 %v774
        %792 = vmatprep.subr.bf16.mxu0 0
        %793 = vmatpush1.bf16.msra.mxu0 %v775
        %794 = vmatprep.subr.bf16.mxu0 0
        %795 = vmatpush1.bf16.msra.mxu0 %v776
        %796 = vmatprep.subr.bf16.mxu0 0
        %797 = vmatpush1.bf16.msra.mxu0 %v777
        %798 = vmatprep.subr.bf16.mxu0 0
        %799 = vmatpush1.bf16.msra.mxu0 %v778
        %800 = vmatprep.subr.bf16.mxu0 0
        %801 = vmatpush1.bf16.msra.mxu0 %v779
        %802 = vmatprep.subr.bf16.mxu0 0
        %803 = vmatpush1.bf16.msra.mxu0 %v780
        %804 = vmatprep.subr.bf16.mxu0 0
        %805 = vmatpush1.bf16.msra.mxu0 %v781
        %806 = vmatprep.subr.bf16.mxu0 0
        %807 = vmatpush1.bf16.msra.mxu0 0
        %808 = vmatprep.subr.bf16.mxu0 0
        %809 = vmatpush1.bf16.msra.mxu0 0
        %810 = vmatprep.subr.bf16.mxu0 0
        %811 = vmatpush1.bf16.msra.mxu0 0
        %812 = vmatprep.subr.bf16.mxu0 0
        %813 = vmatpush1.bf16.msra.mxu0 0
        %814 = vmatprep.subr.bf16.mxu0 0
        %815 = vmatpush1.bf16.msra.mxu0 0
        %816 = vmatprep.subr.bf16.mxu0 0
        %817 = vmatpush1.bf16.msra.mxu0 0
        %818 = vmatprep.subr.bf16.mxu0 0
        %819 = vmatpush1.bf16.msra.mxu0 0
        %820 = vmatprep.subr.bf16.mxu0 0
        %821 = vmatpush1.bf16.msra.mxu0 0
        %822 = vmatprep.mubr.bf16.mxu0 0
        %823 = vmatmul.mubr.bf16.gmra.mrb[0].mxu0 %v732
        %v824 = vpop.f32.mrb[0].mxu0
        %v825 = vadd.f32 %v740, %v824
        %v826 = vpop.f32.mrb[0].mxu0
        %v827 = vpop.f32.mrb[0].mxu0
        %v828 = vadd.f32 %v740, %v827
        %v829 = vpop.f32.mrb[0].mxu0
        %830 = vmatprep.mubr.bf16.mxu0 0
        %831 = vmatmul.mubr.bf16.gmra.mrb[0].mxu0 %v733
        %v832 = vpop.f32.mrb[0].mxu0
        %v833 = vadd.f32 %v740, %v832
        %v834 = vpop.f32.mrb[0].mxu0
        %v835 = vpop.f32.mrb[0].mxu0
        %v836 = vadd.f32 %v740, %v835
        %v837 = vpop.f32.mrb[0].mxu0
        %838 = vmatprep.mubr.bf16.mxu0 0
        %839 = vmatmul.mubr.bf16.gmra.mrb[0].mxu0 %v734
        %v840 = vpop.f32.mrb[0].mxu0
        %v841 = vadd.f32 %v740, %v840
        %v842 = vpop.f32.mrb[0].mxu0
        %v843 = vpop.f32.mrb[0].mxu0
        %v844 = vadd.f32 %v740, %v843
        %v845 = vpop.f32.mrb[0].mxu0
        %846 = vmatprep.mubr.bf16.mxu0 0
        %847 = vmatmul.mubr.bf16.gmra.mrb[0].mxu0 %v735
        %v848 = vpop.f32.mrb[0].mxu0
        %v849 = vadd.f32 %v740, %v848
        %v850 = vpop.f32.mrb[0].mxu0
        %v851 = vpop.f32.mrb[0].mxu0
        %v852 = vpop.f32.mrb[0].mxu0
        %853 = vdwg.mxu0
        %v854 = vtanh.pop %v825
        %v855 = vtanh.pop %v828
        %v856 = vtanh.pop %v833
        %v857 = vtanh.pop %v836
        %v858 = vtanh.pop %v841
        %v859 = vtanh.pop %v844
        %v860 = vtanh.pop %v849
        %v861 = vadd.f32 %v854, %v706
        %v862 = vadd.f32 %v855, %v707
        %v863 = vadd.f32 %v856, %v708
        %v864 = vadd.f32 %v857, %v709
        %v865 = vadd.f32 %v858, %v710
        %v866 = vadd.f32 %v859, %v711
        %v867 = vadd.f32 %v860, %v712
        %s868 = scalar_lea.vmem [#allocation2], 192
        %v869 = vld [vmem:[%s868] sm:$0xf]
        %v870 = vld [vmem:[%s868 + $0x4] sm:$0xf]
        %v871 = vld [vmem:[%s868 + $0x8] sm:$0xf]
        %v872 = vld [vmem:[%s868 + $0xc] sm:$0xf]
        %v873 = vld [vmem:[%s868 + $0x10] sm:$0xf]
        %v874 = vld [vmem:[%s868 + $0x14] sm:$0xf]
        %v875 = vld [vmem:[%s868 + $0x18] sm:$0xf]
        %v876 = vld [vmem:[%s868 + $0x1c] sm:$0xf]
        %v877 = vld [vmem:[%s868 + $0x20] sm:$0xf]
        %v878 = vld [vmem:[%s868 + $0x24] sm:$0xf]
        %v879 = vld [vmem:[%s868 + $0x28] sm:$0xf]
        %v880 = vld [vmem:[%s868 + $0x2c] sm:$0xf]
        %v881 = vld [vmem:[%s868 + $0x30] sm:$0xf]
        %v882 = vld [vmem:[%s868 + $0x34] sm:$0xf]
        %v883 = vld [vmem:[%s868 + $0x38] sm:$0xf]
        %v884 = vld [vmem:[%s868 + $0x3c] sm:$0xf]
        %s885 = scalar_lea.vmem %s4, 3
        %v886 = vld [vmem:[%s885] sm:$0x1]
        %v887 = vpack.c.bf16 %v862, %v861
        %v888 = vpack.c.bf16 %v864, %v863
        %v889 = vpack.c.bf16 %v866, %v865
        %v890 = vpack.c.bf16 %v867, %v867
        %v892 = vlaneseq
        %v893 = vshrl.u32 %v892, 7
        %v894 = vsub.s32 0, %v893
        %v895 = vrot.slane %v886, %v894
        %v913 = vunpack.c.l.b16 %v869
        %v914 = vunpack.c.l.b16 %v870
        %v915 = vunpack.c.l.b16 %v871
        %v916 = vunpack.c.l.b16 %v872
        %v917 = vunpack.c.l.b16 %v873
        %v918 = vunpack.c.l.b16 %v874
        %v919 = vunpack.c.l.b16 %v875
        %v920 = vunpack.c.l.b16 %v876
        %v921 = vunpack.c.l.b16 %v877
        %v922 = vunpack.c.l.b16 %v878
        %v923 = vunpack.c.l.b16 %v879
        %v924 = vunpack.c.l.b16 %v880
        %v925 = vunpack.c.l.b16 %v881
        %v926 = vunpack.c.l.b16 %v882
        %v927 = vunpack.c.l.b16 %v883
        %v928 = vunpack.c.l.b16 %v884
        %v929 = vpack.c.b16 %v914, %v913
        %v930 = vpack.c.b16 %v916, %v915
        %v931 = vpack.c.b16 %v918, %v917
        %v932 = vpack.c.b16 %v920, %v919
        %v933 = vpack.c.b16 %v922, %v921
        %v934 = vpack.c.b16 %v924, %v923
        %v935 = vpack.c.b16 %v926, %v925
        %v936 = vpack.c.b16 %v928, %v927
        %945 = vmatprep.subr.bf16.mxu0 0
        %946 = vmatpush1.bf16.msra.mxu0 %v929
        %947 = vmatprep.subr.bf16.mxu0 0
        %948 = vmatpush1.bf16.msra.mxu0 %v930
        %949 = vmatprep.subr.bf16.mxu0 0
        %950 = vmatpush1.bf16.msra.mxu0 %v931
        %951 = vmatprep.subr.bf16.mxu0 0
        %952 = vmatpush1.bf16.msra.mxu0 %v932
        %953 = vmatprep.subr.bf16.mxu0 0
        %954 = vmatpush1.bf16.msra.mxu0 %v933
        %955 = vmatprep.subr.bf16.mxu0 0
        %956 = vmatpush1.bf16.msra.mxu0 %v934
        %957 = vmatprep.subr.bf16.mxu0 0
        %958 = vmatpush1.bf16.msra.mxu0 %v935
        %959 = vmatprep.subr.bf16.mxu0 0
        %960 = vmatpush1.bf16.msra.mxu0 %v936
        %961 = vmatprep.subr.bf16.mxu0 0
        %962 = vmatpush1.bf16.msra.mxu0 0
        %963 = vmatprep.subr.bf16.mxu0 0
        %964 = vmatpush1.bf16.msra.mxu0 0
        %965 = vmatprep.subr.bf16.mxu0 0
        %966 = vmatpush1.bf16.msra.mxu0 0
        %967 = vmatprep.subr.bf16.mxu0 0
        %968 = vmatpush1.bf16.msra.mxu0 0
        %969 = vmatprep.subr.bf16.mxu0 0
        %970 = vmatpush1.bf16.msra.mxu0 0
        %971 = vmatprep.subr.bf16.mxu0 0
        %972 = vmatpush1.bf16.msra.mxu0 0
        %973 = vmatprep.subr.bf16.mxu0 0
        %974 = vmatpush1.bf16.msra.mxu0 0
        %975 = vmatprep.subr.bf16.mxu0 0
        %976 = vmatpush1.bf16.msra.mxu0 0
        %977 = vmatprep.mubr.bf16.mxu0 0
        %978 = vmatmul.mubr.bf16.gmra.mrb[0].mxu0 %v887
        %v979 = vpop.f32.mrb[0].mxu0
        %v980 = vadd.f32 %v895, %v979
        %v981 = vpop.f32.mrb[0].mxu0
        %v982 = vpop.f32.mrb[0].mxu0
        %v983 = vadd.f32 %v895, %v982
        %v984 = vpop.f32.mrb[0].mxu0
        %985 = vmatprep.mubr.bf16.mxu0 0
        %986 = vmatmul.mubr.bf16.gmra.mrb[0].mxu0 %v888
        %v987 = vpop.f32.mrb[0].mxu0
        %v988 = vadd.f32 %v895, %v987
        %v989 = vpop.f32.mrb[0].mxu0
        %v990 = vpop.f32.mrb[0].mxu0
        %v991 = vadd.f32 %v895, %v990
        %v992 = vpop.f32.mrb[0].mxu0
        %993 = vmatprep.mubr.bf16.mxu0 0
        %994 = vmatmul.mubr.bf16.gmra.mrb[0].mxu0 %v889
        %v995 = vpop.f32.mrb[0].mxu0
        %v996 = vadd.f32 %v895, %v995
        %v997 = vpop.f32.mrb[0].mxu0
        %v998 = vpop.f32.mrb[0].mxu0
        %v999 = vadd.f32 %v895, %v998
        %v1000 = vpop.f32.mrb[0].mxu0
        %1001 = vmatprep.mubr.bf16.mxu0 0
        %1002 = vmatmul.mubr.bf16.gmra.mrb[0].mxu0 %v890
        %v1003 = vpop.f32.mrb[0].mxu0
        %v1004 = vadd.f32 %v895, %v1003
        %v1005 = vpop.f32.mrb[0].mxu0
        %v1006 = vpop.f32.mrb[0].mxu0
        %v1007 = vpop.f32.mrb[0].mxu0
        %1008 = vdwg.mxu0
        %v1009 = vtanh.pop %v980
        %v1010 = vtanh.pop %v983
        %v1011 = vtanh.pop %v988
        %v1012 = vtanh.pop %v991
        %v1013 = vtanh.pop %v996
        %v1014 = vtanh.pop %v999
        %v1015 = vtanh.pop %v1004
        %v1016 = vadd.f32 %v1009, %v861
        %v1017 = vadd.f32 %v1010, %v862
        %v1018 = vadd.f32 %v1011, %v863
        %v1019 = vadd.f32 %v1012, %v864
        %v1020 = vadd.f32 %v1013, %v865
        %v1021 = vadd.f32 %v1014, %v866
        %v1022 = vadd.f32 %v1015, %v867
        %s1023 = scalar_lea.vmem [#allocation2], 256
        %v1024 = vld [vmem:[%s1023] sm:$0xf]
        %v1025 = vld [vmem:[%s1023 + $0x4] sm:$0xf]
        %v1026 = vld [vmem:[%s1023 + $0x8] sm:$0xf]
        %v1027 = vld [vmem:[%s1023 + $0xc] sm:$0xf]
        %v1028 = vld [vmem:[%s1023 + $0x10] sm:$0xf]
        %v1029 = vld [vmem:[%s1023 + $0x14] sm:$0xf]
        %v1030 = vld [vmem:[%s1023 + $0x18] sm:$0xf]
        %v1031 = vld [vmem:[%s1023 + $0x1c] sm:$0xf]
        %v1032 = vld [vmem:[%s1023 + $0x20] sm:$0xf]
        %v1033 = vld [vmem:[%s1023 + $0x24] sm:$0xf]
        %v1034 = vld [vmem:[%s1023 + $0x28] sm:$0xf]
        %v1035 = vld [vmem:[%s1023 + $0x2c] sm:$0xf]
        %v1036 = vld [vmem:[%s1023 + $0x30] sm:$0xf]
        %v1037 = vld [vmem:[%s1023 + $0x34] sm:$0xf]
        %v1038 = vld [vmem:[%s1023 + $0x38] sm:$0xf]
        %v1039 = vld [vmem:[%s1023 + $0x3c] sm:$0xf]
        %s1040 = scalar_lea.vmem %s4, 4
        %v1041 = vld [vmem:[%s1040] sm:$0x1]
        %v1042 = vpack.c.bf16 %v1017, %v1016
        %v1043 = vpack.c.bf16 %v1019, %v1018
        %v1044 = vpack.c.bf16 %v1021, %v1020
        %v1045 = vpack.c.bf16 %v1022, %v1022
        %v1047 = vlaneseq
        %v1048 = vshrl.u32 %v1047, 7
        %v1049 = vsub.s32 0, %v1048
        %v1050 = vrot.slane %v1041, %v1049
        %v1068 = vunpack.c.l.b16 %v1024
        %v1069 = vunpack.c.l.b16 %v1025
        %v1070 = vunpack.c.l.b16 %v1026
        %v1071 = vunpack.c.l.b16 %v1027
        %v1072 = vunpack.c.l.b16 %v1028
        %v1073 = vunpack.c.l.b16 %v1029
        %v1074 = vunpack.c.l.b16 %v1030
        %v1075 = vunpack.c.l.b16 %v1031
        %v1076 = vunpack.c.l.b16 %v1032
        %v1077 = vunpack.c.l.b16 %v1033
        %v1078 = vunpack.c.l.b16 %v1034
        %v1079 = vunpack.c.l.b16 %v1035
        %v1080 = vunpack.c.l.b16 %v1036
        %v1081 = vunpack.c.l.b16 %v1037
        %v1082 = vunpack.c.l.b16 %v1038
        %v1083 = vunpack.c.l.b16 %v1039
        %v1084 = vpack.c.b16 %v1069, %v1068
        %v1085 = vpack.c.b16 %v1071, %v1070
        %v1086 = vpack.c.b16 %v1073, %v1072
        %v1087 = vpack.c.b16 %v1075, %v1074
        %v1088 = vpack.c.b16 %v1077, %v1076
        %v1089 = vpack.c.b16 %v1079, %v1078
        %v1090 = vpack.c.b16 %v1081, %v1080
        %v1091 = vpack.c.b16 %v1083, %v1082
        %1100 = vmatprep.subr.bf16.mxu0 0
        %1101 = vmatpush1.bf16.msra.mxu0 %v1084
        %1102 = vmatprep.subr.bf16.mxu0 0
        %1103 = vmatpush1.bf16.msra.mxu0 %v1085
        %1104 = vmatprep.subr.bf16.mxu0 0
        %1105 = vmatpush1.bf16.msra.mxu0 %v1086
        %1106 = vmatprep.subr.bf16.mxu0 0
        %1107 = vmatpush1.bf16.msra.mxu0 %v1087
        %1108 = vmatprep.subr.bf16.mxu0 0
        %1109 = vmatpush1.bf16.msra.mxu0 %v1088
        %1110 = vmatprep.subr.bf16.mxu0 0
        %1111 = vmatpush1.bf16.msra.mxu0 %v1089
        %1112 = vmatprep.subr.bf16.mxu0 0
        %1113 = vmatpush1.bf16.msra.mxu0 %v1090
        %1114 = vmatprep.subr.bf16.mxu0 0
        %1115 = vmatpush1.bf16.msra.mxu0 %v1091
        %1116 = vmatprep.subr.bf16.mxu0 0
        %1117 = vmatpush1.bf16.msra.mxu0 0
        %1118 = vmatprep.subr.bf16.mxu0 0
        %1119 = vmatpush1.bf16.msra.mxu0 0
        %1120 = vmatprep.subr.bf16.mxu0 0
        %1121 = vmatpush1.bf16.msra.mxu0 0
        %1122 = vmatprep.subr.bf16.mxu0 0
        %1123 = vmatpush1.bf16.msra.mxu0 0
        %1124 = vmatprep.subr.bf16.mxu0 0
        %1125 = vmatpush1.bf16.msra.mxu0 0
        %1126 = vmatprep.subr.bf16.mxu0 0
        %1127 = vmatpush1.bf16.msra.mxu0 0
        %1128 = vmatprep.subr.bf16.mxu0 0
        %1129 = vmatpush1.bf16.msra.mxu0 0
        %1130 = vmatprep.subr.bf16.mxu0 0
        %1131 = vmatpush1.bf16.msra.mxu0 0
        %1132 = vmatprep.mubr.bf16.mxu0 0
        %1133 = vmatmul.mubr.bf16.gmra.mrb[0].mxu0 %v1042
        %v1134 = vpop.f32.mrb[0].mxu0
        %v1135 = vadd.f32 %v1050, %v1134
        %v1136 = vpop.f32.mrb[0].mxu0
        %v1137 = vpop.f32.mrb[0].mxu0
        %v1138 = vadd.f32 %v1050, %v1137
        %v1139 = vpop.f32.mrb[0].mxu0
        %1140 = vmatprep.mubr.bf16.mxu0 0
        %1141 = vmatmul.mubr.bf16.gmra.mrb[0].mxu0 %v1043
        %v1142 = vpop.f32.mrb[0].mxu0
        %v1143 = vadd.f32 %v1050, %v1142
        %v1144 = vpop.f32.mrb[0].mxu0
        %v1145 = vpop.f32.mrb[0].mxu0
        %v1146 = vadd.f32 %v1050, %v1145
        %v1147 = vpop.f32.mrb[0].mxu0
        %1148 = vmatprep.mubr.bf16.mxu0 0
        %1149 = vmatmul.mubr.bf16.gmra.mrb[0].mxu0 %v1044
        %v1150 = vpop.f32.mrb[0].mxu0
        %v1151 = vadd.f32 %v1050, %v1150
        %v1152 = vpop.f32.mrb[0].mxu0
        %v1153 = vpop.f32.mrb[0].mxu0
        %v1154 = vadd.f32 %v1050, %v1153
        %v1155 = vpop.f32.mrb[0].mxu0
        %1156 = vmatprep.mubr.bf16.mxu0 0
        %1157 = vmatmul.mubr.bf16.gmra.mrb[0].mxu0 %v1045
        %v1158 = vpop.f32.mrb[0].mxu0
        %v1159 = vadd.f32 %v1050, %v1158
        %v1160 = vpop.f32.mrb[0].mxu0
        %v1161 = vpop.f32.mrb[0].mxu0
        %v1162 = vpop.f32.mrb[0].mxu0
        %1163 = vdwg.mxu0
        %v1164 = vtanh.pop %v1135
        %v1165 = vtanh.pop %v1138
        %v1166 = vtanh.pop %v1143
        %v1167 = vtanh.pop %v1146
        %v1168 = vtanh.pop %v1151
        %v1169 = vtanh.pop %v1154
        %v1170 = vtanh.pop %v1159
        %v1171 = vadd.f32 %v1164, %v1016
        %v1172 = vadd.f32 %v1165, %v1017
        %v1173 = vadd.f32 %v1166, %v1018
        %v1174 = vadd.f32 %v1167, %v1019
        %v1175 = vadd.f32 %v1168, %v1020
        %v1176 = vadd.f32 %v1169, %v1021
        %v1177 = vadd.f32 %v1170, %v1022
        %s1178 = scalar_lea.vmem [#allocation2], 320
        %v1179 = vld [vmem:[%s1178] sm:$0xf]
        %v1180 = vld [vmem:[%s1178 + $0x4] sm:$0xf]
        %v1181 = vld [vmem:[%s1178 + $0x8] sm:$0xf]
        %v1182 = vld [vmem:[%s1178 + $0xc] sm:$0xf]
        %v1183 = vld [vmem:[%s1178 + $0x10] sm:$0xf]
        %v1184 = vld [vmem:[%s1178 + $0x14] sm:$0xf]
        %v1185 = vld [vmem:[%s1178 + $0x18] sm:$0xf]
        %v1186 = vld [vmem:[%s1178 + $0x1c] sm:$0xf]
        %v1187 = vld [vmem:[%s1178 + $0x20] sm:$0xf]
        %v1188 = vld [vmem:[%s1178 + $0x24] sm:$0xf]
        %v1189 = vld [vmem:[%s1178 + $0x28] sm:$0xf]
        %v1190 = vld [vmem:[%s1178 + $0x2c] sm:$0xf]
        %v1191 = vld [vmem:[%s1178 + $0x30] sm:$0xf]
        %v1192 = vld [vmem:[%s1178 + $0x34] sm:$0xf]
        %v1193 = vld [vmem:[%s1178 + $0x38] sm:$0xf]
        %v1194 = vld [vmem:[%s1178 + $0x3c] sm:$0xf]
        %s1195 = scalar_lea.vmem %s4, 5
        %v1196 = vld [vmem:[%s1195] sm:$0x1]
        %v1197 = vpack.c.bf16 %v1172, %v1171
        %v1198 = vpack.c.bf16 %v1174, %v1173
        %v1199 = vpack.c.bf16 %v1176, %v1175
        %v1200 = vpack.c.bf16 %v1177, %v1177
        %v1202 = vlaneseq
        %v1203 = vshrl.u32 %v1202, 7
        %v1204 = vsub.s32 0, %v1203
        %v1205 = vrot.slane %v1196, %v1204
        %v1223 = vunpack.c.l.b16 %v1179
        %v1224 = vunpack.c.l.b16 %v1180
        %v1225 = vunpack.c.l.b16 %v1181
        %v1226 = vunpack.c.l.b16 %v1182
        %v1227 = vunpack.c.l.b16 %v1183
        %v1228 = vunpack.c.l.b16 %v1184
        %v1229 = vunpack.c.l.b16 %v1185
        %v1230 = vunpack.c.l.b16 %v1186
        %v1231 = vunpack.c.l.b16 %v1187
        %v1232 = vunpack.c.l.b16 %v1188
        %v1233 = vunpack.c.l.b16 %v1189
        %v1234 = vunpack.c.l.b16 %v1190
        %v1235 = vunpack.c.l.b16 %v1191
        %v1236 = vunpack.c.l.b16 %v1192
        %v1237 = vunpack.c.l.b16 %v1193
        %v1238 = vunpack.c.l.b16 %v1194
        %v1239 = vpack.c.b16 %v1224, %v1223
        %v1240 = vpack.c.b16 %v1226, %v1225
        %v1241 = vpack.c.b16 %v1228, %v1227
        %v1242 = vpack.c.b16 %v1230, %v1229
        %v1243 = vpack.c.b16 %v1232, %v1231
        %v1244 = vpack.c.b16 %v1234, %v1233
        %v1245 = vpack.c.b16 %v1236, %v1235
        %v1246 = vpack.c.b16 %v1238, %v1237
        %1255 = vmatprep.subr.bf16.mxu0 0
        %1256 = vmatpush1.bf16.msra.mxu0 %v1239
        %1257 = vmatprep.subr.bf16.mxu0 0
        %1258 = vmatpush1.bf16.msra.mxu0 %v1240
        %1259 = vmatprep.subr.bf16.mxu0 0
        %1260 = vmatpush1.bf16.msra.mxu0 %v1241
        %1261 = vmatprep.subr.bf16.mxu0 0
        %1262 = vmatpush1.bf16.msra.mxu0 %v1242
        %1263 = vmatprep.subr.bf16.mxu0 0
        %1264 = vmatpush1.bf16.msra.mxu0 %v1243
        %1265 = vmatprep.subr.bf16.mxu0 0
        %1266 = vmatpush1.bf16.msra.mxu0 %v1244
        %1267 = vmatprep.subr.bf16.mxu0 0
        %1268 = vmatpush1.bf16.msra.mxu0 %v1245
        %1269 = vmatprep.subr.bf16.mxu0 0
        %1270 = vmatpush1.bf16.msra.mxu0 %v1246
        %1271 = vmatprep.subr.bf16.mxu0 0
        %1272 = vmatpush1.bf16.msra.mxu0 0
        %1273 = vmatprep.subr.bf16.mxu0 0
        %1274 = vmatpush1.bf16.msra.mxu0 0
        %1275 = vmatprep.subr.bf16.mxu0 0
        %1276 = vmatpush1.bf16.msra.mxu0 0
        %1277 = vmatprep.subr.bf16.mxu0 0
        %1278 = vmatpush1.bf16.msra.mxu0 0
        %1279 = vmatprep.subr.bf16.mxu0 0
        %1280 = vmatpush1.bf16.msra.mxu0 0
        %1281 = vmatprep.subr.bf16.mxu0 0
        %1282 = vmatpush1.bf16.msra.mxu0 0
        %1283 = vmatprep.subr.bf16.mxu0 0
        %1284 = vmatpush1.bf16.msra.mxu0 0
        %1285 = vmatprep.subr.bf16.mxu0 0
        %1286 = vmatpush1.bf16.msra.mxu0 0
        %1287 = vmatprep.mubr.bf16.mxu0 0
        %1288 = vmatmul.mubr.bf16.gmra.mrb[0].mxu0 %v1197
        %v1289 = vpop.f32.mrb[0].mxu0
        %v1290 = vadd.f32 %v1205, %v1289
        %v1291 = vpop.f32.mrb[0].mxu0
        %v1292 = vpop.f32.mrb[0].mxu0
        %v1293 = vadd.f32 %v1205, %v1292
        %v1294 = vpop.f32.mrb[0].mxu0
        %1295 = vmatprep.mubr.bf16.mxu0 0
        %1296 = vmatmul.mubr.bf16.gmra.mrb[0].mxu0 %v1198
        %v1297 = vpop.f32.mrb[0].mxu0
        %v1298 = vadd.f32 %v1205, %v1297
        %v1299 = vpop.f32.mrb[0].mxu0
        %v1300 = vpop.f32.mrb[0].mxu0
        %v1301 = vadd.f32 %v1205, %v1300
        %v1302 = vpop.f32.mrb[0].mxu0
        %1303 = vmatprep.mubr.bf16.mxu0 0
        %1304 = vmatmul.mubr.bf16.gmra.mrb[0].mxu0 %v1199
        %v1305 = vpop.f32.mrb[0].mxu0
        %v1306 = vadd.f32 %v1205, %v1305
        %v1307 = vpop.f32.mrb[0].mxu0
        %v1308 = vpop.f32.mrb[0].mxu0
        %v1309 = vadd.f32 %v1205, %v1308
        %v1310 = vpop.f32.mrb[0].mxu0
        %1311 = vmatprep.mubr.bf16.mxu0 0
        %1312 = vmatmul.mubr.bf16.gmra.mrb[0].mxu0 %v1200
        %v1313 = vpop.f32.mrb[0].mxu0
        %v1314 = vadd.f32 %v1205, %v1313
        %v1315 = vpop.f32.mrb[0].mxu0
        %v1316 = vpop.f32.mrb[0].mxu0
        %v1317 = vpop.f32.mrb[0].mxu0
        %1318 = vdwg.mxu0
        %v1319 = vtanh.pop %v1290
        %v1320 = vtanh.pop %v1293
        %v1321 = vtanh.pop %v1298
        %v1322 = vtanh.pop %v1301
        %v1323 = vtanh.pop %v1306
        %v1324 = vtanh.pop %v1309
        %v1325 = vtanh.pop %v1314
        %v1326 = vadd.f32 %v1319, %v1171
        %v1327 = vadd.f32 %v1320, %v1172
        %v1328 = vadd.f32 %v1321, %v1173
        %v1329 = vadd.f32 %v1322, %v1174
        %v1330 = vadd.f32 %v1323, %v1175
        %v1331 = vadd.f32 %v1324, %v1176
        %v1332 = vadd.f32 %v1325, %v1177
        %s1333 = scalar_lea.vmem [#allocation2], 384
        %v1334 = vld [vmem:[%s1333] sm:$0xf]
        %v1335 = vld [vmem:[%s1333 + $0x4] sm:$0xf]
        %v1336 = vld [vmem:[%s1333 + $0x8] sm:$0xf]
        %v1337 = vld [vmem:[%s1333 + $0xc] sm:$0xf]
        %v1338 = vld [vmem:[%s1333 + $0x10] sm:$0xf]
        %v1339 = vld [vmem:[%s1333 + $0x14] sm:$0xf]
        %v1340 = vld [vmem:[%s1333 + $0x18] sm:$0xf]
        %v1341 = vld [vmem:[%s1333 + $0x1c] sm:$0xf]
        %v1342 = vld [vmem:[%s1333 + $0x20] sm:$0xf]
        %v1343 = vld [vmem:[%s1333 + $0x24] sm:$0xf]
        %v1344 = vld [vmem:[%s1333 + $0x28] sm:$0xf]
        %v1345 = vld [vmem:[%s1333 + $0x2c] sm:$0xf]
        %v1346 = vld [vmem:[%s1333 + $0x30] sm:$0xf]
        %v1347 = vld [vmem:[%s1333 + $0x34] sm:$0xf]
        %v1348 = vld [vmem:[%s1333 + $0x38] sm:$0xf]
        %v1349 = vld [vmem:[%s1333 + $0x3c] sm:$0xf]
        %s1350 = scalar_lea.vmem %s4, 6
        %v1351 = vld [vmem:[%s1350] sm:$0x1]
        %v1352 = vpack.c.bf16 %v1327, %v1326
        %v1353 = vpack.c.bf16 %v1329, %v1328
        %v1354 = vpack.c.bf16 %v1331, %v1330
        %v1355 = vpack.c.bf16 %v1332, %v1332
        %v1357 = vlaneseq
        %v1358 = vshrl.u32 %v1357, 7
        %v1359 = vsub.s32 0, %v1358
        %v1360 = vrot.slane %v1351, %v1359
        %v1378 = vunpack.c.l.b16 %v1334
        %v1379 = vunpack.c.l.b16 %v1335
        %v1380 = vunpack.c.l.b16 %v1336
        %v1381 = vunpack.c.l.b16 %v1337
        %v1382 = vunpack.c.l.b16 %v1338
        %v1383 = vunpack.c.l.b16 %v1339
        %v1384 = vunpack.c.l.b16 %v1340
        %v1385 = vunpack.c.l.b16 %v1341
        %v1386 = vunpack.c.l.b16 %v1342
        %v1387 = vunpack.c.l.b16 %v1343
        %v1388 = vunpack.c.l.b16 %v1344
        %v1389 = vunpack.c.l.b16 %v1345
        %v1390 = vunpack.c.l.b16 %v1346
        %v1391 = vunpack.c.l.b16 %v1347
        %v1392 = vunpack.c.l.b16 %v1348
        %v1393 = vunpack.c.l.b16 %v1349
        %v1394 = vpack.c.b16 %v1379, %v1378
        %v1395 = vpack.c.b16 %v1381, %v1380
        %v1396 = vpack.c.b16 %v1383, %v1382
        %v1397 = vpack.c.b16 %v1385, %v1384
        %v1398 = vpack.c.b16 %v1387, %v1386
        %v1399 = vpack.c.b16 %v1389, %v1388
        %v1400 = vpack.c.b16 %v1391, %v1390
        %v1401 = vpack.c.b16 %v1393, %v1392
        %1410 = vmatprep.subr.bf16.mxu0 0
        %1411 = vmatpush1.bf16.msra.mxu0 %v1394
        %1412 = vmatprep.subr.bf16.mxu0 0
        %1413 = vmatpush1.bf16.msra.mxu0 %v1395
        %1414 = vmatprep.subr.bf16.mxu0 0
        %1415 = vmatpush1.bf16.msra.mxu0 %v1396
        %1416 = vmatprep.subr.bf16.mxu0 0
        %1417 = vmatpush1.bf16.msra.mxu0 %v1397
        %1418 = vmatprep.subr.bf16.mxu0 0
        %1419 = vmatpush1.bf16.msra.mxu0 %v1398
        %1420 = vmatprep.subr.bf16.mxu0 0
        %1421 = vmatpush1.bf16.msra.mxu0 %v1399
        %1422 = vmatprep.subr.bf16.mxu0 0
        %1423 = vmatpush1.bf16.msra.mxu0 %v1400
        %1424 = vmatprep.subr.bf16.mxu0 0
        %1425 = vmatpush1.bf16.msra.mxu0 %v1401
        %1426 = vmatprep.subr.bf16.mxu0 0
        %1427 = vmatpush1.bf16.msra.mxu0 0
        %1428 = vmatprep.subr.bf16.mxu0 0
        %1429 = vmatpush1.bf16.msra.mxu0 0
        %1430 = vmatprep.subr.bf16.mxu0 0
        %1431 = vmatpush1.bf16.msra.mxu0 0
        %1432 = vmatprep.subr.bf16.mxu0 0
        %1433 = vmatpush1.bf16.msra.mxu0 0
        %1434 = vmatprep.subr.bf16.mxu0 0
        %1435 = vmatpush1.bf16.msra.mxu0 0
        %1436 = vmatprep.subr.bf16.mxu0 0
        %1437 = vmatpush1.bf16.msra.mxu0 0
        %1438 = vmatprep.subr.bf16.mxu0 0
        %1439 = vmatpush1.bf16.msra.mxu0 0
        %1440 = vmatprep.subr.bf16.mxu0 0
        %1441 = vmatpush1.bf16.msra.mxu0 0
        %1442 = vmatprep.mubr.bf16.mxu0 0
        %1443 = vmatmul.mubr.bf16.gmra.mrb[0].mxu0 %v1352
        %v1444 = vpop.f32.mrb[0].mxu0
        %v1445 = vadd.f32 %v1360, %v1444
        %v1446 = vpop.f32.mrb[0].mxu0
        %v1447 = vpop.f32.mrb[0].mxu0
        %v1448 = vadd.f32 %v1360, %v1447
        %v1449 = vpop.f32.mrb[0].mxu0
        %1450 = vmatprep.mubr.bf16.mxu0 0
        %1451 = vmatmul.mubr.bf16.gmra.mrb[0].mxu0 %v1353
        %v1452 = vpop.f32.mrb[0].mxu0
        %v1453 = vadd.f32 %v1360, %v1452
        %v1454 = vpop.f32.mrb[0].mxu0
        %v1455 = vpop.f32.mrb[0].mxu0
        %v1456 = vadd.f32 %v1360, %v1455
        %v1457 = vpop.f32.mrb[0].mxu0
        %1458 = vmatprep.mubr.bf16.mxu0 0
        %1459 = vmatmul.mubr.bf16.gmra.mrb[0].mxu0 %v1354
        %v1460 = vpop.f32.mrb[0].mxu0
        %v1461 = vadd.f32 %v1360, %v1460
        %v1462 = vpop.f32.mrb[0].mxu0
        %v1463 = vpop.f32.mrb[0].mxu0
        %v1464 = vadd.f32 %v1360, %v1463
        %v1465 = vpop.f32.mrb[0].mxu0
        %1466 = vmatprep.mubr.bf16.mxu0 0
        %1467 = vmatmul.mubr.bf16.gmra.mrb[0].mxu0 %v1355
        %v1468 = vpop.f32.mrb[0].mxu0
        %v1469 = vadd.f32 %v1360, %v1468
        %v1470 = vpop.f32.mrb[0].mxu0
        %v1471 = vpop.f32.mrb[0].mxu0
        %v1472 = vpop.f32.mrb[0].mxu0
        %1473 = vdwg.mxu0
        %v1474 = vtanh.pop %v1445
        %v1475 = vtanh.pop %v1448
        %v1476 = vtanh.pop %v1453
        %v1477 = vtanh.pop %v1456
        %v1478 = vtanh.pop %v1461
        %v1479 = vtanh.pop %v1464
        %v1480 = vtanh.pop %v1469
        %v1481 = vadd.f32 %v1474, %v1326
        %v1482 = vadd.f32 %v1475, %v1327
        %v1483 = vadd.f32 %v1476, %v1328
        %v1484 = vadd.f32 %v1477, %v1329
        %v1485 = vadd.f32 %v1478, %v1330
        %v1486 = vadd.f32 %v1479, %v1331
        %v1487 = vadd.f32 %v1480, %v1332
        %v1488 = vld [vmem:[%s5] sm:$0x1]
        %v1489 = vlaneseq
        %v1490 = vshrl.u32 %v1489, 7
        %v1491 = vsub.s32 0, %v1490
        %v1492 = vrot.slane %v1488, %v1491
        %v1493 = vmul.f32 %v1481, %v1492
        %v1494 = vmul.f32 %v1482, %v1492
        %v1495 = vmul.f32 %v1483, %v1492
        %v1496 = vmul.f32 %v1484, %v1492
        %v1497 = vmul.f32 %v1485, %v1492
        %v1498 = vmul.f32 %v1486, %v1492
        %v1499 = vmul.f32 %v1487, %v1492
        %1500 = vadd.xlane.f32.xlu0 %v1493
        %v1501 = vpop.xlane.xlu0 %1500
        %1502 = vadd.xlane.f32.xlu0 %v1494
        %v1503 = vpop.xlane.xlu0 %1502
        %1504 = vadd.xlane.f32.xlu0 %v1495
        %v1505 = vpop.xlane.xlu0 %1504
        %1506 = vadd.xlane.f32.xlu0 %v1496
        %v1507 = vpop.xlane.xlu0 %1506
        %1508 = vadd.xlane.f32.xlu0 %v1497
        %v1509 = vpop.xlane.xlu0 %1508
        %1510 = vadd.xlane.f32.xlu0 %v1498
        %v1511 = vpop.xlane.xlu0 %1510
        %1512 = vadd.xlane.f32.xlu0 %v1499
        %v1513 = vpop.xlane.xlu0 %1512
        %v1514 = vld [vmem:[%s5 + $0x1] sm:$0x1]
        %v1515 = vlaneseq
        %v1516 = vshrl.u32 %v1515, 7
        %v1517 = vsub.s32 0, %v1516
        %v1518 = vrot.slane %v1514, %v1517
        %v1519 = vmul.f32 %v1481, %v1518
        %v1520 = vmul.f32 %v1482, %v1518
        %v1521 = vmul.f32 %v1483, %v1518
        %v1522 = vmul.f32 %v1484, %v1518
        %v1523 = vmul.f32 %v1485, %v1518
        %v1524 = vmul.f32 %v1486, %v1518
        %v1525 = vmul.f32 %v1487, %v1518
        %1526 = vadd.xlane.f32.xlu0 %v1519
        %v1527 = vpop.xlane.xlu0 %1526
        %1528 = vadd.xlane.f32.xlu0 %v1520
        %v1529 = vpop.xlane.xlu0 %1528
        %1530 = vadd.xlane.f32.xlu0 %v1521
        %v1531 = vpop.xlane.xlu0 %1530
        %1532 = vadd.xlane.f32.xlu0 %v1522
        %v1533 = vpop.xlane.xlu0 %1532
        %1534 = vadd.xlane.f32.xlu0 %v1523
        %v1535 = vpop.xlane.xlu0 %1534
        %1536 = vadd.xlane.f32.xlu0 %v1524
        %v1537 = vpop.xlane.xlu0 %1536
        %1538 = vadd.xlane.f32.xlu0 %v1525
        %v1539 = vpop.xlane.xlu0 %1538
        %vm1540 = vcmask 7168
        %v1541 = vsel %vm1540, %v1501, %v1527
        %v1542 = vsel %vm1540, %v1503, %v1529
        %v1543 = vsel %vm1540, %v1505, %v1531
        %v1544 = vsel %vm1540, %v1507, %v1533
        %v1545 = vsel %vm1540, %v1509, %v1535
        %v1546 = vsel %vm1540, %v1511, %v1537
        %v1547 = vsel %vm1540, %v1513, %v1539
        %v1548 = vld [vmem:[%s6] sm:$0x1]
        %v1550 = vlaneseq
        %v1551 = vshrl.u32 %v1550, 7
        %v1552 = vsub.s32 0, %v1551
        %v1553 = vrot.slane %v1548, %v1552
        %v1555 = vadd.f32 %v1541, %v1553
        %v1556 = vadd.f32 %v1542, %v1553
        %v1557 = vadd.f32 %v1543, %v1553
        %v1558 = vadd.f32 %v1544, %v1553
        %v1559 = vadd.f32 %v1545, %v1553
        %v1560 = vadd.f32 %v1546, %v1553
        %v1561 = vadd.f32 %v1547, %v1553
        %vm1562 = vcmask 15360
        %1563 = vst.msk [vmem:[%s295] sm:$0xff] %vm1562, %v1555
        %1564 = vst.msk [vmem:[%s295 + $0x8] sm:$0xff] %vm1562, %v1556
        %1565 = vst.msk [vmem:[%s295 + $0x10] sm:$0xff] %vm1562, %v1557
        %1566 = vst.msk [vmem:[%s295 + $0x18] sm:$0xff] %vm1562, %v1558
        %1567 = vst.msk [vmem:[%s295 + $0x20] sm:$0xff] %vm1562, %v1559
        %1568 = vst.msk [vmem:[%s295 + $0x28] sm:$0xff] %vm1562, %v1560
        %1569 = vst.msk [vmem:[%s295 + $0x30] sm:$0xff] %vm1562, %v1561
        %s1570 = smul.u32 7, %s19
        %p1571 = scmp.lt.s32.totalorder %s1570, 13
        %s1572 = scalar_select %p1571, %s1570, 13
        %s1573 = smul.addr %s1572, 8
        %s1574 = scalar_lea.vmem %s7, %s1573
        // Predicated region
        $region53: #{u_net_deep_narrow_resnet_forward.1} parent=47 // pred_check
          %p1575 = pneg %p189
        $region54: #{u_net_deep_narrow_resnet_forward.1} parent=47 // pred_check_branch
          %1577 = sbr.rel (%p1575) target = $region56
        $region55: #{u_net_deep_narrow_resnet_forward.1} parent=47 // pred_region
          %s1578 = smul.u32 7, %s19
        $region56: #{u_net_deep_narrow_resnet_forward.1} parent=47 // pred_fallthru
          _
      $region48: #{u_net_deep_narrow_resnet_forward.1} parent=5 // pred_fallthru
        _
      %p1579 = scmp.le.s32.totalorder 2, %s14
      // Predicated region
      $region57: #{u_net_deep_narrow_resnet_forward.1} parent=5 // pred_check
        %p1580 = pneg %p1579
      $region58: #{u_net_deep_narrow_resnet_forward.1} parent=5 // pred_check_branch
        %1582 = sbr.rel (%p1580) target = $region60
      $region59: #{u_net_deep_narrow_resnet_forward.1} parent=5 // pred_region
        %s1583 = ssub.s32 %s14, 2
        // Predicated region
        $region61: #{u_net_deep_narrow_resnet_forward.1} parent=59 // pred_check
          %p1584 = pneg %p195
        $region62: #{u_net_deep_narrow_resnet_forward.1} parent=59 // pred_check_branch
          %1586 = sbr.rel (%p1584) target = $region64
        $region63: #{u_net_deep_narrow_resnet_forward.1} parent=59 // pred_region
          %s1587 = smul.u32 7, %s20
          %p1588 = scmp.lt.s32.totalorder %s1587, 13
          %s1589 = scalar_select %p1588, %s1587, 13
          %s1590 = smul.addr %s1589, 8
          %s1591 = scalar_lea.vmem %s7, %s1590
        $region64: #{u_net_deep_narrow_resnet_forward.1} parent=59 // pred_fallthru
          _
      $region60: #{u_net_deep_narrow_resnet_forward.1} parent=5 // pred_fallthru
        _
    $region6: #{u_net_deep_narrow_resnet_forward.1} parent=1 // loop_footer
      %s18 = sadd.s32 1, %s14
    $region7: #{u_net_deep_narrow_resnet_forward.1} parent=1 // loop_footer_branch
      %13 = sbr.rel target = $region3
    $region8: #{u_net_deep_narrow_resnet_forward.1} parent=1 // loop_exit
      _
    %1592 = vsyncpa [#allocation3], 1
    %s1593 = scalar_lea.sflag [#allocation3], 1
    %1594 = vsyncpa %s1593, 1

</llo_original>
